<compile_context>
chip_gen: v6e
topology: v6e:2x2x1
jax: 0.10.0
libtpu: 0.0.40
codegen_flags: <defaults>
</compile_context>

<pallas_src>
import math

import jax
import jax.numpy as jnp
from jax.experimental import pallas as pl
from jax.experimental.pallas import tpu as pltpu


def _round_up(x, m):
    return (x + m - 1) // m * m


def _pad2(x, rows, cols):
    pr, pc = rows - x.shape[0], cols - x.shape[1]
    if pr or pc:
        x = jnp.pad(x, ((0, pr), (0, pc)))
    return x


# --------------------------------------------------------------------------
# Kernel 1: S = X @ W  (row-tiled dense matmul, bf16 operands, f32 acc)
# --------------------------------------------------------------------------
def _xw_kernel(x_ref, w_ref, o_ref):
    o_ref[...] = jnp.dot(
        x_ref[...], w_ref[...], preferred_element_type=jnp.float32
    ).astype(o_ref.dtype)


def _dense_xw(x, w, *, block_m):
    n_pad, f_pad = x.shape
    h_pad = w.shape[1]
    return pl.pallas_call(
        _xw_kernel,
        out_shape=jax.ShapeDtypeStruct((n_pad, h_pad), jnp.bfloat16),
        grid=(n_pad // block_m,),
        in_specs=[
            pl.BlockSpec((block_m, f_pad), lambda i: (i, 0)),
            pl.BlockSpec((f_pad, h_pad), lambda i: (0, 0)),
        ],
        out_specs=pl.BlockSpec((block_m, h_pad), lambda i: (i, 0)),
        compiler_params=pltpu.CompilerParams(dimension_semantics=("parallel",)),
    )(x, w)


# --------------------------------------------------------------------------
# Kernel 2: S2 = relu(A @ S1) @ W2   (propagation + relu + layer-2 X@W fused)
# --------------------------------------------------------------------------
def _prop_relu_w_kernel(a_ref, s_ref, w_ref, o_ref, acc_ref):
    k = pl.program_id(1)

    @pl.when(k == 0)
    def _():
        acc_ref[...] = jnp.zeros_like(acc_ref)

    acc_ref[...] += jnp.dot(
        a_ref[...], s_ref[...], preferred_element_type=jnp.float32
    )

    @pl.when(k == pl.num_programs(1) - 1)
    def _():
        h = jnp.maximum(acc_ref[...], 0.0).astype(s_ref.dtype)
        o_ref[...] = jnp.dot(
            h, w_ref[...], preferred_element_type=jnp.float32
        ).astype(o_ref.dtype)


def _propagate_relu_w(a, s, w, *, block_m, block_k):
    n_pad = a.shape[0]
    h_pad = s.shape[1]
    c_pad = w.shape[1]
    return pl.pallas_call(
        _prop_relu_w_kernel,
        out_shape=jax.ShapeDtypeStruct((n_pad, c_pad), jnp.bfloat16),
        grid=(n_pad // block_m, n_pad // block_k),
        in_specs=[
            pl.BlockSpec((block_m, block_k), lambda i, k: (i, k)),
            pl.BlockSpec((block_k, h_pad), lambda i, k: (k, 0)),
            pl.BlockSpec((h_pad, c_pad), lambda i, k: (0, 0)),
        ],
        out_specs=pl.BlockSpec((block_m, c_pad), lambda i, k: (i, 0)),
        scratch_shapes=[pltpu.VMEM((block_m, h_pad), jnp.float32)],
        compiler_params=pltpu.CompilerParams(
            dimension_semantics=("parallel", "arbitrary")
        ),
    )(a, s, w)


# --------------------------------------------------------------------------
# Kernel 3: OUT = A @ S2   (plain tiled propagation, f32 output)
# --------------------------------------------------------------------------
def _prop_kernel(a_ref, s_ref, o_ref, acc_ref):
    k = pl.program_id(1)

    @pl.when(k == 0)
    def _():
        acc_ref[...] = jnp.zeros_like(acc_ref)

    acc_ref[...] += jnp.dot(
        a_ref[...], s_ref[...], preferred_element_type=jnp.float32
    )

    @pl.when(k == pl.num_programs(1) - 1)
    def _():
        o_ref[...] = acc_ref[...].astype(o_ref.dtype)


def _propagate(a, s, *, block_m, block_k):
    n_pad = a.shape[0]
    c_pad = s.shape[1]
    return pl.pallas_call(
        _prop_kernel,
        out_shape=jax.ShapeDtypeStruct((n_pad, c_pad), jnp.float32),
        grid=(n_pad // block_m, n_pad // block_k),
        in_specs=[
            pl.BlockSpec((block_m, block_k), lambda i, k: (i, k)),
            pl.BlockSpec((block_k, c_pad), lambda i, k: (k, 0)),
        ],
        out_specs=pl.BlockSpec((block_m, c_pad), lambda i, k: (i, 0)),
        scratch_shapes=[pltpu.VMEM((block_m, c_pad), jnp.float32)],
        compiler_params=pltpu.CompilerParams(
            dimension_semantics=("parallel", "arbitrary")
        ),
    )(a, s)


# --------------------------------------------------------------------------
# Full forward
# --------------------------------------------------------------------------
def gcn_forward(x, a_norm, w1, w2, *, block_m=256, block_k=512):
    """GCN forward: A @ (relu(A @ (x @ W1)) @ W2)  (eval mode)."""
    assert block_m % 128 == 0 and block_k % 128 == 0
    n, nfeat = x.shape
    nhid = w1.shape[1]
    nclass = w2.shape[1]

    n_pad = _round_up(n, math.lcm(block_m, block_k))
    f_pad = _round_up(nfeat, 128)
    h_pad = _round_up(nhid, 128)
    c_pad = _round_up(nclass, 128)   # lane-dense class dim; sliced at the end

    # bf16 MXU operands (f32 accumulation inside the kernels).
    xb = _pad2(x, n_pad, f_pad).astype(jnp.bfloat16)
    ab = _pad2(a_norm, n_pad, n_pad).astype(jnp.bfloat16)
    w1b = _pad2(w1, f_pad, h_pad).astype(jnp.bfloat16)
    w2b = _pad2(w2, h_pad, c_pad).astype(jnp.bfloat16)

    # FLOP-optimal ordering: X@W first (N x F x H), then propagate with A.
    s1 = _dense_xw(xb, w1b, block_m=block_m)                       # (n_pad, h_pad)
    # TODO(synk): F.dropout(p=0.5, training=True) path not implemented; this
    # reproduces eval-mode semantics (dropout == identity). A training-mode
    # path would use pltpu.prng_seed / pltpu.prng_random_bits in-kernel.
    s2 = _propagate_relu_w(ab, s1, w2b, block_m=block_m, block_k=block_k)
    out = _propagate(ab, s2, block_m=block_m, block_k=block_k)     # (n_pad, c_pad)

    return out[:n, :nclass]


def xavier_uniform(key, fan_in, fan_out):
    bound = jnp.sqrt(6.0 / (fan_in + fan_out))
    return jax.random.uniform(
        key, (fan_in, fan_out), dtype=jnp.float32, minval=-bound, maxval=bound
    )


def gcn_reference(x, a_norm, w1, w2):
    """Pure-JAX reference with matching bf16-operand / f32-accum rounding."""
    xb = x.astype(jnp.bfloat16)
    ab = a_norm.astype(jnp.bfloat16)
    w1b = w1.astype(jnp.bfloat16)
    w2b = w2.astype(jnp.bfloat16)
    s1 = jnp.dot(xb, w1b, preferred_element_type=jnp.float32).astype(jnp.bfloat16)
    h = jnp.maximum(
        jnp.dot(ab, s1, preferred_element_type=jnp.float32), 0.0
    ).astype(jnp.bfloat16)
    s2 = jnp.dot(h, w2b, preferred_element_type=jnp.float32).astype(jnp.bfloat16)
    return jnp.dot(ab, s2, preferred_element_type=jnp.float32)


if __name__ == "__main__":
    # Small-but-tiled shapes: N=300 nodes (padded to 384 -> 3x3 grid with
    # 128x128 tiles), nfeat=64, nhid=32, nclass=8.
    N, NFEAT, NHID, NCLASS = 300, 64, 32, 8

    key = jax.random.PRNGKey(0)
    k_x, k_a, k_w1, k_w2 = jax.random.split(key, 4)

    x = jax.random.normal(k_x, (N, NFEAT), dtype=jnp.float32)

    # Symmetric normalized adjacency A_norm = D^-1/2 (A + I) D^-1/2.
    raw = jax.random.uniform(k_a, (N, N), dtype=jnp.float32)
    adj = (raw > 0.95).astype(jnp.float32)
    adj = jnp.maximum(adj, adj.T) + jnp.eye(N, dtype=jnp.float32)
    deg_inv_sqrt = 1.0 / jnp.sqrt(adj.sum(axis=1))
    a_norm = adj * deg_inv_sqrt[:, None] * deg_inv_sqrt[None, :]

    w1 = xavier_uniform(k_w1, NFEAT, NHID)
    w2 = xavier_uniform(k_w2, NHID, NCLASS)

    fwd = jax.jit(
        lambda x_, a_, w1_, w2_: gcn_forward(
            x_, a_, w1_, w2_, block_m=128, block_k=128
        )
    )
    out = jax.block_until_ready(fwd(x, a_norm, w1, w2))

    ref = gcn_reference(x, a_norm, w1, w2)
    assert out.shape == (N, NCLASS)
    assert jnp.allclose(out, ref, atol=2e-2, rtol=2e-2), (
        float(jnp.max(jnp.abs(out - ref)))
    )

    print("KERNEL_OK")
</pallas_src>

<mosaic_0001>
module attributes {stable_mosaic.version = 11 : i64} {
  func.func @_prop_kernel(%arg0: i32, %arg1: i32, %arg2: memref<128x128xbf16, #tpu.memory_space<vmem>>, %arg3: memref<128x128xbf16, #tpu.memory_space<vmem>>, %arg4: memref<128x128xf32, #tpu.memory_space<vmem>>, %arg5: memref<128x128xf32, #tpu.memory_space<vmem>>) attributes {dimension_semantics = [#tpu.dimension_semantics<parallel>, #tpu.dimension_semantics<arbitrary>], iteration_bounds = array<i64: 3, 3>, scalar_prefetch = 0 : i64, scratch_operands = 1 : i64, tpu.core_type = #tpu.core_type<tc>, window_params = [{transform_indices = @transform_0, window_bounds = array<i64: 128, 128>}, {transform_indices = @transform_1, window_bounds = array<i64: 128, 128>}, {transform_indices = @transform_2, window_bounds = array<i64: 128, 128>}]} {
    %c0_i32 = arith.constant 0 : i32
    %0 = arith.cmpi eq, %arg1, %c0_i32 : i32
    %1 = arith.extui %0 : i1 to i32
    %c0_i32_0 = arith.constant 0 : i32
    %2 = arith.cmpi ne, %1, %c0_i32_0 : i32
    scf.if %2 {
      %cst_9 = arith.constant 0.000000e+00 : f32
      %12 = vector.broadcast %cst_9 : f32 to vector<128x128xf32>
      %c0_10 = arith.constant 0 : index
      %c0_11 = arith.constant 0 : index
      %13 = vector.load %arg5[%c0_10, %c0_11] : memref<128x128xf32, #tpu.memory_space<vmem>>, vector<128x128xf32>
      tpu.vector_store %arg5[%c0_10, %c0_11], %12 {strides = array<i32>} : memref<128x128xf32, #tpu.memory_space<vmem>>, vector<128x128xf32>,
    } else {
    }
    %c0 = arith.constant 0 : index
    %c0_1 = arith.constant 0 : index
    %3 = vector.load %arg5[%c0, %c0_1] : memref<128x128xf32, #tpu.memory_space<vmem>>, vector<128x128xf32>
    %c0_2 = arith.constant 0 : index
    %c0_3 = arith.constant 0 : index
    %4 = vector.load %arg2[%c0_2, %c0_3] : memref<128x128xbf16, #tpu.memory_space<vmem>>, vector<128x128xbf16>
    %c0_4 = arith.constant 0 : index
    %c0_5 = arith.constant 0 : index
    %5 = vector.load %arg3[%c0_4, %c0_5] : memref<128x128xbf16, #tpu.memory_space<vmem>>, vector<128x128xbf16>
    %cst = arith.constant dense<0.000000e+00> : vector<128x128xf32>
    %6 = tpu.matmul %4, %5, %cst {dimension_numbers = #tpu.dot_dimension_numbers<[1], [0], [0], [1], [0, 0, 1, 1], [], []>} : vector<128x128xbf16>, vector<128x128xbf16>, vector<128x128xf32> -> vector<128x128xf32>
    %7 = arith.addf %3, %6 : vector<128x128xf32>
    %c0_6 = arith.constant 0 : index
    %c0_7 = arith.constant 0 : index
    %8 = vector.load %arg5[%c0_6, %c0_7] : memref<128x128xf32, #tpu.memory_space<vmem>>, vector<128x128xf32>
    tpu.vector_store %arg5[%c0_6, %c0_7], %7 {strides = array<i32>} : memref<128x128xf32, #tpu.memory_space<vmem>>, vector<128x128xf32>,
    %c2_i32 = arith.constant 2 : i32
    %9 = arith.cmpi eq, %arg1, %c2_i32 : i32
    %10 = arith.extui %9 : i1 to i32
    %c0_i32_8 = arith.constant 0 : i32
    %11 = arith.cmpi ne, %10, %c0_i32_8 : i32
    scf.if %11 {
      %c0_9 = arith.constant 0 : index
      %c0_10 = arith.constant 0 : index
      %12 = vector.load %arg5[%c0_9, %c0_10] : memref<128x128xf32, #tpu.memory_space<vmem>>, vector<128x128xf32>
      %c0_11 = arith.constant 0 : index
      %c0_12 = arith.constant 0 : index
      %13 = vector.load %arg4[%c0_11, %c0_12] : memref<128x128xf32, #tpu.memory_space<vmem>>, vector<128x128xf32>
      tpu.vector_store %arg4[%c0_11, %c0_12], %12 {strides = array<i32>} : memref<128x128xf32, #tpu.memory_space<vmem>>, vector<128x128xf32>,
    } else {
    }
    return
  }
  func.func @transform_0(%arg0: i32, %arg1: i32) -> (i32, i32) {
    %c0_i32 = arith.constant 0 : i32
    return %arg0, %arg1 : i32, i32
  }
  func.func @transform_1(%arg0: i32, %arg1: i32) -> (i32, i32) {
    %c0_i32 = arith.constant 0 : i32
    %c0_i32_0 = arith.constant 0 : i32
    return %arg1, %c0_i32 : i32, i32
  }
  func.func @transform_2(%arg0: i32, %arg1: i32) -> (i32, i32) {
    %c0_i32 = arith.constant 0 : i32
    %c0_i32_0 = arith.constant 0 : i32
    return %arg0, %c0_i32 : i32, i32
  }
}

module attributes {stable_mosaic.version = 11 : i64} {
  func.func @_xw_kernel(%arg0: i32, %arg1: memref<128x128xbf16, #tpu.memory_space<vmem>>, %arg2: memref<128x128xbf16, #tpu.memory_space<vmem>>, %arg3: memref<128x128xbf16, #tpu.memory_space<vmem>>) attributes {dimension_semantics = [#tpu.dimension_semantics<parallel>], iteration_bounds = array<i64: 3>, scalar_prefetch = 0 : i64, scratch_operands = 0 : i64, tpu.core_type = #tpu.core_type<tc>, window_params = [{transform_indices = @transform_0, window_bounds = array<i64: 128, 128>}, {pipeline_mode = #tpu.pipeline_mode<synchronous>, transform_indices = @transform_1, window_bounds = array<i64: 128, 128>}, {transform_indices = @transform_2, window_bounds = array<i64: 128, 128>}]} {
    %c0 = arith.constant 0 : index
    %c0_0 = arith.constant 0 : index
    %0 = vector.load %arg1[%c0, %c0_0] : memref<128x128xbf16, #tpu.memory_space<vmem>>, vector<128x128xbf16>
    %c0_1 = arith.constant 0 : index
    %c0_2 = arith.constant 0 : index
    %1 = vector.load %arg2[%c0_1, %c0_2] : memref<128x128xbf16, #tpu.memory_space<vmem>>, vector<128x128xbf16>
    %cst = arith.constant dense<0.000000e+00> : vector<128x128xf32>
    %2 = tpu.matmul %0, %1, %cst {dimension_numbers = #tpu.dot_dimension_numbers<[1], [0], [0], [1], [0, 0, 1, 1], [], []>} : vector<128x128xbf16>, vector<128x128xbf16>, vector<128x128xf32> -> vector<128x128xf32>
    %3 = arith.truncf %2 : vector<128x128xf32> to vector<128x128xbf16>
    %c0_3 = arith.constant 0 : index
    %c0_4 = arith.constant 0 : index
    %4 = vector.load %arg3[%c0_3, %c0_4] : memref<128x128xbf16, #tpu.memory_space<vmem>>, vector<128x128xbf16>
    tpu.vector_store %arg3[%c0_3, %c0_4], %3 {strides = array<i32>} : memref<128x128xbf16, #tpu.memory_space<vmem>>, vector<128x128xbf16>,
    return
  }
  func.func @transform_0(%arg0: i32) -> (i32, i32) {
    %c0_i32 = arith.constant 0 : i32
    %c0_i32_0 = arith.constant 0 : i32
    return %arg0, %c0_i32 : i32, i32
  }
  func.func @transform_1(%arg0: i32) -> (i32, i32) {
    %c0_i32 = arith.constant 0 : i32
    %c0_i32_0 = arith.constant 0 : i32
    %c0_i32_1 = arith.constant 0 : i32
    return %c0_i32, %c0_i32_0 : i32, i32
  }
  func.func @transform_2(%arg0: i32) -> (i32, i32) {
    %c0_i32 = arith.constant 0 : i32
    %c0_i32_0 = arith.constant 0 : i32
    return %arg0, %c0_i32 : i32, i32
  }
}

module attributes {stable_mosaic.version = 11 : i64} {
  func.func @_prop_relu_w_kernel(%arg0: i32, %arg1: i32, %arg2: memref<128x128xbf16, #tpu.memory_space<vmem>>, %arg3: memref<128x128xbf16, #tpu.memory_space<vmem>>, %arg4: memref<128x128xbf16, #tpu.memory_space<vmem>>, %arg5: memref<128x128xbf16, #tpu.memory_space<vmem>>, %arg6: memref<128x128xf32, #tpu.memory_space<vmem>>) attributes {dimension_semantics = [#tpu.dimension_semantics<parallel>, #tpu.dimension_semantics<arbitrary>], iteration_bounds = array<i64: 3, 3>, scalar_prefetch = 0 : i64, scratch_operands = 1 : i64, tpu.core_type = #tpu.core_type<tc>, window_params = [{transform_indices = @transform_0, window_bounds = array<i64: 128, 128>}, {transform_indices = @transform_1, window_bounds = array<i64: 128, 128>}, {pipeline_mode = #tpu.pipeline_mode<synchronous>, transform_indices = @transform_2, window_bounds = array<i64: 128, 128>}, {transform_indices = @transform_3, window_bounds = array<i64: 128, 128>}]} {
    %c0_i32 = arith.constant 0 : i32
    %0 = arith.cmpi eq, %arg1, %c0_i32 : i32
    %1 = arith.extui %0 : i1 to i32
    %c0_i32_0 = arith.constant 0 : i32
    %2 = arith.cmpi ne, %1, %c0_i32_0 : i32
    scf.if %2 {
      %cst_9 = arith.constant 0.000000e+00 : f32
      %12 = vector.broadcast %cst_9 : f32 to vector<128x128xf32>
      %c0_10 = arith.constant 0 : index
      %c0_11 = arith.constant 0 : index
      %13 = vector.load %arg6[%c0_10, %c0_11] : memref<128x128xf32, #tpu.memory_space<vmem>>, vector<128x128xf32>
      tpu.vector_store %arg6[%c0_10, %c0_11], %12 {strides = array<i32>} : memref<128x128xf32, #tpu.memory_space<vmem>>, vector<128x128xf32>,
    } else {
    }
    %c0 = arith.constant 0 : index
    %c0_1 = arith.constant 0 : index
    %3 = vector.load %arg6[%c0, %c0_1] : memref<128x128xf32, #tpu.memory_space<vmem>>, vector<128x128xf32>
    %c0_2 = arith.constant 0 : index
    %c0_3 = arith.constant 0 : index
    %4 = vector.load %arg2[%c0_2, %c0_3] : memref<128x128xbf16, #tpu.memory_space<vmem>>, vector<128x128xbf16>
    %c0_4 = arith.constant 0 : index
    %c0_5 = arith.constant 0 : index
    %5 = vector.load %arg3[%c0_4, %c0_5] : memref<128x128xbf16, #tpu.memory_space<vmem>>, vector<128x128xbf16>
    %cst = arith.constant dense<0.000000e+00> : vector<128x128xf32>
    %6 = tpu.matmul %4, %5, %cst {dimension_numbers = #tpu.dot_dimension_numbers<[1], [0], [0], [1], [0, 0, 1, 1], [], []>} : vector<128x128xbf16>, vector<128x128xbf16>, vector<128x128xf32> -> vector<128x128xf32>
    %7 = arith.addf %3, %6 : vector<128x128xf32>
    %c0_6 = arith.constant 0 : index
    %c0_7 = arith.constant 0 : index
    %8 = vector.load %arg6[%c0_6, %c0_7] : memref<128x128xf32, #tpu.memory_space<vmem>>, vector<128x128xf32>
    tpu.vector_store %arg6[%c0_6, %c0_7], %7 {strides = array<i32>} : memref<128x128xf32, #tpu.memory_space<vmem>>, vector<128x128xf32>,
    %c2_i32 = arith.constant 2 : i32
    %9 = arith.cmpi eq, %arg1, %c2_i32 : i32
    %10 = arith.extui %9 : i1 to i32
    %c0_i32_8 = arith.constant 0 : i32
    %11 = arith.cmpi ne, %10, %c0_i32_8 : i32
    scf.if %11 {
      %c0_9 = arith.constant 0 : index
      %c0_10 = arith.constant 0 : index
      %12 = vector.load %arg6[%c0_9, %c0_10] : memref<128x128xf32, #tpu.memory_space<vmem>>, vector<128x128xf32>
      %cst_11 = arith.constant 0.000000e+00 : f32
      %13 = vector.broadcast %cst_11 : f32 to vector<128x128xf32>
      %14 = arith.maximumf %12, %13 : vector<128x128xf32>
      %15 = arith.truncf %14 : vector<128x128xf32> to vector<128x128xbf16>
      %c0_12 = arith.constant 0 : index
      %c0_13 = arith.constant 0 : index
      %16 = vector.load %arg4[%c0_12, %c0_13] : memref<128x128xbf16, #tpu.memory_space<vmem>>, vector<128x128xbf16>
      %cst_14 = arith.constant dense<0.000000e+00> : vector<128x128xf32>
      %17 = tpu.matmul %15, %16, %cst_14 {dimension_numbers = #tpu.dot_dimension_numbers<[1], [0], [0], [1], [0, 0, 1, 1], [], []>} : vector<128x128xbf16>, vector<128x128xbf16>, vector<128x128xf32> -> vector<128x128xf32>
      %18 = arith.truncf %17 : vector<128x128xf32> to vector<128x128xbf16>
      %c0_15 = arith.constant 0 : index
      %c0_16 = arith.constant 0 : index
      %19 = vector.load %arg5[%c0_15, %c0_16] : memref<128x128xbf16, #tpu.memory_space<vmem>>, vector<128x128xbf16>
      tpu.vector_store %arg5[%c0_15, %c0_16], %18 {strides = array<i32>} : memref<128x128xbf16, #tpu.memory_space<vmem>>, vector<128x128xbf16>,
    } else {
    }
    return
  }
  func.func @transform_0(%arg0: i32, %arg1: i32) -> (i32, i32) {
    %c0_i32 = arith.constant 0 : i32
    return %arg0, %arg1 : i32, i32
  }
  func.func @transform_1(%arg0: i32, %arg1: i32) -> (i32, i32) {
    %c0_i32 = arith.constant 0 : i32
    %c0_i32_0 = arith.constant 0 : i32
    return %arg1, %c0_i32 : i32, i32
  }
  func.func @transform_2(%arg0: i32, %arg1: i32) -> (i32, i32) {
    %c0_i32 = arith.constant 0 : i32
    %c0_i32_0 = arith.constant 0 : i32
    %c0_i32_1 = arith.constant 0 : i32
    return %c0_i32, %c0_i32_0 : i32, i32
  }
  func.func @transform_3(%arg0: i32, %arg1: i32) -> (i32, i32) {
    %c0_i32 = arith.constant 0 : i32
    %c0_i32_0 = arith.constant 0 : i32
    return %arg0, %c0_i32 : i32, i32
  }
}

</mosaic_0001>

<llo_original>
// kernel: _lambda_.3
$region0: #{_lambda_.3}
  #allocation0 [shape = 'u32[]', space=smem, size = 0x4, offset = 0x4, fixed_abs, tag = 'smem constant byte address 0x4 - core index']
  #allocation1 [shape = 'u32[144,128]{1,0:T(1,128)}', space=vmem, size = 0x12000, scoped, tag = 'internal scratch']
  %s0 = inlined_call_operand.vmem [shape: bf16[384,128], index: 0, kind: input, shape index: {}]
  %s1 = inlined_call_operand.vmem [shape: bf16[128,128], index: 1, kind: input, shape index: {}]
  %s2 = inlined_call_operand.vmem [shape: bf16[384,128], index: 2, kind: output, shape index: {}]
  %s3 = sld [smem:[#allocation0]]
  $region41: #{_lambda_.3} parent=0
    _
  %s5 = ssub.s32 1, %s3
  %s6 = scalar_select 0, %s5, %s3
  loop: start=0, step=1, limit=5
  $region2: #{_lambda_.3} parent=0 // loop_pre_header
    _
  $region3: #{_lambda_.3} parent=0 // loop_header
    %s8 = sphi 0, %s12
    %p9 = scmp.ge.s32.totalorder %s8, 5
    %s18 = sphi 0, %s20
    %s21 = sphi 0, %s18
    %s22 = sphi 0, %s21
    %s38 = sphi 0, %s22
    %s42 = sphi 0, %s42
    %s44 = sphi 0, %s42
    %s45 = sphi 0, %s44
    %s59 = sphi 0, %s45
    %s65 = sphi 0, %s67
    %s68 = sphi 0, %s65
    %s69 = sphi 0, %s68
    %s85 = sphi 0, %s69
  $region4: #{_lambda_.3} parent=0 // loop_header_branch
    %11 = sbr.rel (%p9) target = $region8
  $region5: #{_lambda_.3} parent=0 // loop_body
    %s13 = ssub.s32 %s8, 1
    %s14 = ssub.s32 %s8, 2
    %s15 = sadd.s32 %s8, 1
    %s16 = ssub.s32 %s8, %s15
    %p17 = scmp.eq.s32.totalorder %s16, 0
    %s19 = sadd.s32 %s18, 1
    %s20 = scalar_select %p17, %s18, %s19
    %p23 = pneg %p17
    %p24 = scmp.eq.s32.totalorder %s8, 2
    %p25 = por %p23, %p24
    %p26 = scmp.ne.s32.totalorder %s18, %s21
    %p27 = scmp.eq.s32.totalorder %s8, 0
    %p28 = por %p26, %p27
    %p29 = scmp.ne.s32.totalorder %s18, %s21
    %p30 = scmp.eq.s32.totalorder %s13, 2
    %p31 = por %p29, %p30
    %p32 = scmp.ne.s32.totalorder %s21, %s22
    %p33 = scmp.eq.s32.totalorder %s13, 0
    %p34 = por %p32, %p33
    %p35 = scmp.ne.s32.totalorder %s21, %s22
    %p36 = scmp.eq.s32.totalorder %s14, 2
    %p37 = por %p35, %p36
    %p39 = scmp.ne.s32.totalorder %s22, %s38
    %p40 = scmp.eq.s32.totalorder %s14, 0
    %p41 = por %p39, %p40
    %s43 = sadd.s32 %s42, 1
    %p46 = scmp.eq.s32.totalorder %s8, 2
    %p47 = scmp.ne.s32.totalorder %s42, %s44
    %p48 = scmp.eq.s32.totalorder %s8, 0
    %p49 = por %p47, %p48
    %p50 = scmp.ne.s32.totalorder %s42, %s44
    %p51 = scmp.eq.s32.totalorder %s13, 2
    %p52 = por %p50, %p51
    %p53 = scmp.ne.s32.totalorder %s44, %s45
    %p54 = scmp.eq.s32.totalorder %s13, 0
    %p55 = por %p53, %p54
    %p56 = scmp.ne.s32.totalorder %s44, %s45
    %p57 = scmp.eq.s32.totalorder %s14, 2
    %p58 = por %p56, %p57
    %p60 = scmp.ne.s32.totalorder %s45, %s59
    %p61 = scmp.eq.s32.totalorder %s14, 0
    %p62 = por %p60, %p61
    %s63 = ssub.s32 %s8, %s15
    %p64 = scmp.eq.s32.totalorder %s63, 0
    %s66 = sadd.s32 %s65, 1
    %s67 = scalar_select %p64, %s65, %s66
    %p70 = pneg %p64
    %p71 = scmp.eq.s32.totalorder %s8, 2
    %p72 = por %p70, %p71
    %p73 = scmp.ne.s32.totalorder %s65, %s68
    %p74 = scmp.eq.s32.totalorder %s8, 0
    %p75 = por %p73, %p74
    %p76 = scmp.ne.s32.totalorder %s65, %s68
    %p77 = scmp.eq.s32.totalorder %s13, 2
    %p78 = por %p76, %p77
    %p79 = scmp.ne.s32.totalorder %s68, %s69
    %p80 = scmp.eq.s32.totalorder %s13, 0
    %p81 = por %p79, %p80
    %p82 = scmp.ne.s32.totalorder %s68, %s69
    %p83 = scmp.eq.s32.totalorder %s14, 2
    %p84 = por %p82, %p83
    %p86 = scmp.ne.s32.totalorder %s69, %s85
    %p87 = scmp.eq.s32.totalorder %s14, 0
    %p88 = por %p86, %p87
    %p89 = scmp.le.s32.totalorder 1, %s8
    %p90 = scmp.lt.s32.totalorder %s8, 4
    %p91 = pnand %p89, %p90
    %p92 = pneg %p91
    // Predicated region
    $region9: #{_lambda_.3} parent=5 // pred_check
      _
    $region10: #{_lambda_.3} parent=5 // pred_check_branch
      %94 = sbr.rel (%p91) target = $region12
    $region11: #{_lambda_.3} parent=5 // pred_region
      %s95 = ssub.s32 %s8, 1
      // Predicated region
      $region13: #{_lambda_.3} parent=11 // pred_check
        %p96 = pneg %p55
      $region14: #{_lambda_.3} parent=11 // pred_check_branch
        %98 = sbr.rel (%p96) target = $region16
      $region15: #{_lambda_.3} parent=11 // pred_region
        _
      $region16: #{_lambda_.3} parent=11 // pred_fallthru
        _
    $region12: #{_lambda_.3} parent=5 // pred_fallthru
      _
    %p99 = scmp.lt.s32.totalorder %s8, 3
    // Predicated region
    $region17: #{_lambda_.3} parent=5 // pred_check
      %p100 = pneg %p99
    $region18: #{_lambda_.3} parent=5 // pred_check_branch
      %102 = sbr.rel (%p100) target = $region20
    $region19: #{_lambda_.3} parent=5 // pred_region
      // Predicated region
      $region21: #{_lambda_.3} parent=19 // pred_check
        %p103 = pneg %p28
      $region22: #{_lambda_.3} parent=19 // pred_check_branch
        %105 = sbr.rel (%p103) target = $region24
      $region23: #{_lambda_.3} parent=19 // pred_region
        %s106 = smul.u32 16, %s8
        %p107 = scmp.lt.s32.totalorder %s106, 47
        %s108 = scalar_select %p107, %s106, 47
        %s109 = smul.addr %s108, 4
        %s110 = scalar_lea.vmem %s0, %s109
        %s111 = smul.u32 16, %s8
      $region24: #{_lambda_.3} parent=19 // pred_fallthru
        _
    $region20: #{_lambda_.3} parent=5 // pred_fallthru
      _
    %p112 = scmp.le.s32.totalorder 1, %s8
    %p113 = scmp.lt.s32.totalorder %s8, 4
    %p114 = pnand %p112, %p113
    %p115 = pneg %p114
    // Predicated region
    $region25: #{_lambda_.3} parent=5 // pred_check
      _
    $region26: #{_lambda_.3} parent=5 // pred_check_branch
      %117 = sbr.rel (%p114) target = $region28
    $region27: #{_lambda_.3} parent=5 // pred_region
      %s118 = ssub.s32 %s8, 1
      %s119 = smul.u32 16, %s13
      %p120 = scmp.lt.s32.totalorder %s119, 47
      %s121 = scalar_select %p120, %s119, 47
      %s122 = smul.addr %s121, 4
      %s123 = scalar_lea.vmem %s0, %s122
      %p124 = pneg %p34
      %p125 = pneg %p31
      %p126 = pneg %p55
      %p127 = pneg %p52
      %p128 = pneg %p81
      %p129 = pneg %p78
      %s130 = smul.u32 16, %s13
      %p131 = scmp.lt.s32.totalorder %s130, 47
      %s132 = scalar_select %p131, %s130, 47
      %s133 = smul.addr %s132, 4
      %s134 = scalar_lea.vmem %s2, %s133
      %s135 = smul.u32 16, %s13
      %p136 = scmp.lt.s32.totalorder %s135, 47
      %s137 = scalar_select %p136, %s135, 47
      %s138 = smul.addr %s137, 4
      %s139 = scalar_lea.vmem %s0, %s138
      %s140 = smul.u32 16, %s13
      %s141 = smul.u32 16, %s13
      %p142 = scmp.lt.s32.totalorder %s141, 47
      %s143 = scalar_select %p142, %s141, 47
      %s144 = smul.addr %s143, 4
      %s145 = scalar_lea.vmem %s2, %s144
      %s146 = smul.u32 16, %s13
      %v148 = vld [vmem:[%s139] sm:$0xf]
      %v149 = vld [vmem:[%s139 + $0x4] sm:$0xf]
      %v150 = vld [vmem:[%s139 + $0x8] sm:$0xf]
      %v151 = vld [vmem:[%s139 + $0xc] sm:$0xf]
      %v152 = vld [vmem:[%s139 + $0x10] sm:$0xf]
      %v153 = vld [vmem:[%s139 + $0x14] sm:$0xf]
      %v154 = vld [vmem:[%s139 + $0x18] sm:$0xf]
      %v155 = vld [vmem:[%s139 + $0x1c] sm:$0xf]
      %v156 = vld [vmem:[%s139 + $0x20] sm:$0xf]
      %v157 = vld [vmem:[%s139 + $0x24] sm:$0xf]
      %v158 = vld [vmem:[%s139 + $0x28] sm:$0xf]
      %v159 = vld [vmem:[%s139 + $0x2c] sm:$0xf]
      %v160 = vld [vmem:[%s139 + $0x30] sm:$0xf]
      %v161 = vld [vmem:[%s139 + $0x34] sm:$0xf]
      %v162 = vld [vmem:[%s139 + $0x38] sm:$0xf]
      %v163 = vld [vmem:[%s139 + $0x3c] sm:$0xf]
      %v164 = vld [vmem:[%s1] sm:$0xf]
      %v165 = vld [vmem:[%s1 + $0x4] sm:$0xf]
      %v166 = vld [vmem:[%s1 + $0x8] sm:$0xf]
      %v167 = vld [vmem:[%s1 + $0xc] sm:$0xf]
      %v168 = vld [vmem:[%s1 + $0x10] sm:$0xf]
      %v169 = vld [vmem:[%s1 + $0x14] sm:$0xf]
      %v170 = vld [vmem:[%s1 + $0x18] sm:$0xf]
      %v171 = vld [vmem:[%s1 + $0x1c] sm:$0xf]
      %v172 = vld [vmem:[%s1 + $0x20] sm:$0xf]
      %v173 = vld [vmem:[%s1 + $0x24] sm:$0xf]
      %v174 = vld [vmem:[%s1 + $0x28] sm:$0xf]
      %v175 = vld [vmem:[%s1 + $0x2c] sm:$0xf]
      %v176 = vld [vmem:[%s1 + $0x30] sm:$0xf]
      %v177 = vld [vmem:[%s1 + $0x34] sm:$0xf]
      %v178 = vld [vmem:[%s1 + $0x38] sm:$0xf]
      %v179 = vld [vmem:[%s1 + $0x3c] sm:$0xf]
      %v196 = vunpack.c.l.b16 %v148
      %v197 = vunpack.c.l.b16 %v149
      %v198 = vunpack.c.l.b16 %v150
      %v199 = vunpack.c.l.b16 %v151
      %v200 = vunpack.c.l.b16 %v152
      %v201 = vunpack.c.l.b16 %v153
      %v202 = vunpack.c.l.b16 %v154
      %v203 = vunpack.c.l.b16 %v155
      %v204 = vunpack.c.l.b16 %v156
      %v205 = vunpack.c.l.b16 %v157
      %v206 = vunpack.c.l.b16 %v158
      %v207 = vunpack.c.l.b16 %v159
      %v208 = vunpack.c.l.b16 %v160
      %v209 = vunpack.c.l.b16 %v161
      %v210 = vunpack.c.l.b16 %v162
      %v211 = vunpack.c.l.b16 %v163
      %v212 = vpack.c.b16 %v197, %v196
      %v213 = vpack.c.b16 %v199, %v198
      %v214 = vpack.c.b16 %v201, %v200
      %v215 = vpack.c.b16 %v203, %v202
      %v216 = vpack.c.b16 %v205, %v204
      %v217 = vpack.c.b16 %v207, %v206
      %v218 = vpack.c.b16 %v209, %v208
      %v219 = vpack.c.b16 %v211, %v210
      %v244 = vunpack.c.l.b16 %v164
      %v245 = vunpack.c.l.b16 %v165
      %v246 = vunpack.c.l.b16 %v166
      %v247 = vunpack.c.l.b16 %v167
      %v248 = vunpack.c.l.b16 %v168
      %v249 = vunpack.c.l.b16 %v169
      %v250 = vunpack.c.l.b16 %v170
      %v251 = vunpack.c.l.b16 %v171
      %v252 = vunpack.c.l.b16 %v172
      %v253 = vunpack.c.l.b16 %v173
      %v254 = vunpack.c.l.b16 %v174
      %v255 = vunpack.c.l.b16 %v175
      %v256 = vunpack.c.l.b16 %v176
      %v257 = vunpack.c.l.b16 %v177
      %v258 = vunpack.c.l.b16 %v178
      %v259 = vunpack.c.l.b16 %v179
      %v260 = vpack.c.b16 %v245, %v244
      %v261 = vpack.c.b16 %v247, %v246
      %v262 = vpack.c.b16 %v249, %v248
      %v263 = vpack.c.b16 %v251, %v250
      %v264 = vpack.c.b16 %v253, %v252
      %v265 = vpack.c.b16 %v255, %v254
      %v266 = vpack.c.b16 %v257, %v256
      %v267 = vpack.c.b16 %v259, %v258
      %276 = vmatprep.subr.bf16.mxu0 0
      %277 = vmatpush1.bf16.msra.mxu0 %v267
      %278 = vmatprep.subr.bf16.mxu0 0
      %279 = vmatpush1.bf16.msra.mxu0 %v266
      %280 = vmatprep.subr.bf16.mxu0 0
      %281 = vmatpush1.bf16.msra.mxu0 %v265
      %282 = vmatprep.subr.bf16.mxu0 0
      %283 = vmatpush1.bf16.msra.mxu0 %v264
      %284 = vmatprep.subr.bf16.mxu0 0
      %285 = vmatpush1.bf16.msra.mxu0 %v263
      %286 = vmatprep.subr.bf16.mxu0 0
      %287 = vmatpush1.bf16.msra.mxu0 %v262
      %288 = vmatprep.subr.bf16.mxu0 0
      %289 = vmatpush1.bf16.msra.mxu0 %v261
      %290 = vmatprep.subr.bf16.mxu0 0
      %291 = vmatpush1.bf16.msra.mxu0 %v260
      %292 = vmatprep.subr.bf16.mxu0 0
      %293 = vmatpush2.bf16.msra.mxu0 0
      %294 = vmatprep.subr.bf16.mxu0 0
      %295 = vmatpush2.bf16.msra.mxu0 0
      %296 = vmatprep.subr.bf16.mxu0 0
      %297 = vmatpush2.bf16.msra.mxu0 0
      %298 = vmatprep.subr.bf16.mxu0 0
      %299 = vmatpush2.bf16.msra.mxu0 0
      %300 = vmatprep.subr.bf16.mxu0 0
      %301 = vmatpush2.bf16.msra.mxu0 0
      %302 = vmatprep.subr.bf16.mxu0 0
      %303 = vmatpush2.bf16.msra.mxu0 0
      %304 = vmatprep.subr.bf16.mxu0 0
      %305 = vmatpush2.bf16.msra.mxu0 0
      %306 = vmatprep.subr.bf16.mxu0 0
      %307 = vmatpush2.bf16.msra.mxu0 0
      %308 = vmatprep.mubr.bf16.mxu0 0
      %309 = vmatmul.mubr.bf16.gmra.mxu0 %v212
      %v310 = vpop.f32.mrf.mxu0
      %v311 = vadd.f32 0.0, %v310
      %v312 = vpop.f32.mrf.mxu0
      %v313 = vpop.f32.mrf.mxu0
      %v314 = vadd.f32 0.0, %v313
      %v315 = vpop.f32.mrf.mxu0
      %316 = vmatprep.mubr.bf16.mxu0 0
      %317 = vmatmul.mubr.bf16.gmra.mxu0 %v213
      %v318 = vpop.f32.mrf.mxu0
      %v319 = vadd.f32 0.0, %v318
      %v320 = vpop.f32.mrf.mxu0
      %v321 = vpop.f32.mrf.mxu0
      %v322 = vadd.f32 0.0, %v321
      %v323 = vpop.f32.mrf.mxu0
      %324 = vmatprep.mubr.bf16.mxu0 0
      %325 = vmatmul.mubr.bf16.gmra.mxu0 %v214
      %v326 = vpop.f32.mrf.mxu0
      %v327 = vadd.f32 0.0, %v326
      %v328 = vpop.f32.mrf.mxu0
      %v329 = vpop.f32.mrf.mxu0
      %v330 = vadd.f32 0.0, %v329
      %v331 = vpop.f32.mrf.mxu0
      %332 = vmatprep.mubr.bf16.mxu0 0
      %333 = vmatmul.mubr.bf16.gmra.mxu0 %v215
      %v334 = vpop.f32.mrf.mxu0
      %v335 = vadd.f32 0.0, %v334
      %v336 = vpop.f32.mrf.mxu0
      %v337 = vpop.f32.mrf.mxu0
      %v338 = vadd.f32 0.0, %v337
      %v339 = vpop.f32.mrf.mxu0
      %340 = vmatprep.mubr.bf16.mxu0 0
      %341 = vmatmul.mubr.bf16.gmra.mxu0 %v216
      %v342 = vpop.f32.mrf.mxu0
      %v343 = vadd.f32 0.0, %v342
      %v344 = vpop.f32.mrf.mxu0
      %v345 = vpop.f32.mrf.mxu0
      %v346 = vadd.f32 0.0, %v345
      %v347 = vpop.f32.mrf.mxu0
      %348 = vmatprep.mubr.bf16.mxu0 0
      %349 = vmatmul.mubr.bf16.gmra.mxu0 %v217
      %v350 = vpop.f32.mrf.mxu0
      %v351 = vadd.f32 0.0, %v350
      %v352 = vpop.f32.mrf.mxu0
      %v353 = vpop.f32.mrf.mxu0
      %v354 = vadd.f32 0.0, %v353
      %v355 = vpop.f32.mrf.mxu0
      %356 = vmatprep.mubr.bf16.mxu0 0
      %357 = vmatmul.mubr.bf16.gmra.mxu0 %v218
      %v358 = vpop.f32.mrf.mxu0
      %v359 = vadd.f32 0.0, %v358
      %v360 = vpop.f32.mrf.mxu0
      %v361 = vpop.f32.mrf.mxu0
      %v362 = vadd.f32 0.0, %v361
      %v363 = vpop.f32.mrf.mxu0
      %364 = vmatprep.mubr.bf16.mxu0 0
      %365 = vmatmul.mubr.bf16.gmra.mxu0 %v219
      %v366 = vpop.f32.mrf.mxu0
      %v367 = vadd.f32 0.0, %v366
      %v368 = vpop.f32.mrf.mxu0
      %v369 = vpop.f32.mrf.mxu0
      %v370 = vadd.f32 0.0, %v369
      %v371 = vpop.f32.mrf.mxu0
      %372 = vdwg.mxu0
      %v373 = vpack.c.bf16 %v314, %v311
      %v374 = vpack.c.bf16 %v322, %v319
      %v375 = vpack.c.bf16 %v330, %v327
      %v376 = vpack.c.bf16 %v338, %v335
      %v377 = vpack.c.bf16 %v346, %v343
      %v378 = vpack.c.bf16 %v354, %v351
      %v379 = vpack.c.bf16 %v362, %v359
      %v380 = vpack.c.bf16 %v370, %v367
      %v389 = vunpack.c.l.b16 %v373
      %v390 = vunpack.c.h.b16 %v373
      %v391 = vunpack.c.l.b16 %v374
      %v392 = vunpack.c.h.b16 %v374
      %v393 = vunpack.c.l.b16 %v375
      %v394 = vunpack.c.h.b16 %v375
      %v395 = vunpack.c.l.b16 %v376
      %v396 = vunpack.c.h.b16 %v376
      %v397 = vunpack.c.l.b16 %v377
      %v398 = vunpack.c.h.b16 %v377
      %v399 = vunpack.c.l.b16 %v378
      %v400 = vunpack.c.h.b16 %v378
      %v401 = vunpack.c.l.b16 %v379
      %v402 = vunpack.c.h.b16 %v379
      %v403 = vunpack.c.l.b16 %v380
      %v404 = vunpack.c.h.b16 %v380
      %v405 = vpack.c.b16 %v389, %v389
      %v406 = vpack.c.b16 %v390, %v390
      %v407 = vpack.c.b16 %v391, %v391
      %v408 = vpack.c.b16 %v392, %v392
      %v409 = vpack.c.b16 %v393, %v393
      %v410 = vpack.c.b16 %v394, %v394
      %v411 = vpack.c.b16 %v395, %v395
      %v412 = vpack.c.b16 %v396, %v396
      %v413 = vpack.c.b16 %v397, %v397
      %v414 = vpack.c.b16 %v398, %v398
      %v415 = vpack.c.b16 %v399, %v399
      %v416 = vpack.c.b16 %v400, %v400
      %v417 = vpack.c.b16 %v401, %v401
      %v418 = vpack.c.b16 %v402, %v402
      %v419 = vpack.c.b16 %v403, %v403
      %v420 = vpack.c.b16 %v404, %v404
      %437 = vst [vmem:[%s145] sm:$0xf] %v405
      %438 = vst [vmem:[%s145 + $0x4] sm:$0xf] %v406
      %439 = vst [vmem:[%s145 + $0x8] sm:$0xf] %v407
      %440 = vst [vmem:[%s145 + $0xc] sm:$0xf] %v408
      %441 = vst [vmem:[%s145 + $0x10] sm:$0xf] %v409
      %442 = vst [vmem:[%s145 + $0x14] sm:$0xf] %v410
      %443 = vst [vmem:[%s145 + $0x18] sm:$0xf] %v411
      %444 = vst [vmem:[%s145 + $0x1c] sm:$0xf] %v412
      %445 = vst [vmem:[%s145 + $0x20] sm:$0xf] %v413
      %446 = vst [vmem:[%s145 + $0x24] sm:$0xf] %v414
      %447 = vst [vmem:[%s145 + $0x28] sm:$0xf] %v415
      %448 = vst [vmem:[%s145 + $0x2c] sm:$0xf] %v416
      %449 = vst [vmem:[%s145 + $0x30] sm:$0xf] %v417
      %450 = vst [vmem:[%s145 + $0x34] sm:$0xf] %v418
      %451 = vst [vmem:[%s145 + $0x38] sm:$0xf] %v419
      %452 = vst [vmem:[%s145 + $0x3c] sm:$0xf] %v420
      %s453 = smul.u32 16, %s13
      %p454 = scmp.lt.s32.totalorder %s453, 47
      %s455 = scalar_select %p454, %s453, 47
      %s456 = smul.addr %s455, 4
      %s457 = scalar_lea.vmem %s2, %s456
      // Predicated region
      $region29: #{_lambda_.3} parent=27 // pred_check
        %p458 = pneg %p78
      $region30: #{_lambda_.3} parent=27 // pred_check_branch
        %460 = sbr.rel (%p458) target = $region32
      $region31: #{_lambda_.3} parent=27 // pred_region
        %s461 = smul.u32 16, %s13
      $region32: #{_lambda_.3} parent=27 // pred_fallthru
        _
    $region28: #{_lambda_.3} parent=5 // pred_fallthru
      _
    %p462 = scmp.le.s32.totalorder 2, %s8
    // Predicated region
    $region33: #{_lambda_.3} parent=5 // pred_check
      %p463 = pneg %p462
    $region34: #{_lambda_.3} parent=5 // pred_check_branch
      %465 = sbr.rel (%p463) target = $region36
    $region35: #{_lambda_.3} parent=5 // pred_region
      %s466 = ssub.s32 %s8, 2
      // Predicated region
      $region37: #{_lambda_.3} parent=35 // pred_check
        %p467 = pneg %p84
      $region38: #{_lambda_.3} parent=35 // pred_check_branch
        %469 = sbr.rel (%p467) target = $region40
      $region39: #{_lambda_.3} parent=35 // pred_region
        %s470 = smul.u32 16, %s14
        %p471 = scmp.lt.s32.totalorder %s470, 47
        %s472 = scalar_select %p471, %s470, 47
        %s473 = smul.addr %s472, 4
        %s474 = scalar_lea.vmem %s2, %s473
      $region40: #{_lambda_.3} parent=35 // pred_fallthru
        _
    $region36: #{_lambda_.3} parent=5 // pred_fallthru
      _
  $region6: #{_lambda_.3} parent=0 // loop_footer
    %s12 = sadd.s32 1, %s8
  $region7: #{_lambda_.3} parent=0 // loop_footer_branch
    %7 = sbr.rel target = $region3
  $region8: #{_lambda_.3} parent=0 // loop_exit
    _

// kernel: _lambda_.5
$region0: #{_lambda_.5}
  #allocation0 [shape = 'u32[]', space=smem, size = 0x4, offset = 0x4, fixed_abs, tag = 'smem constant byte address 0x4 - core index']
  #allocation1 [shape = 'u32[144,128]{1,0:T(1,128)}', space=vmem, size = 0x12000, scoped, tag = 'internal scratch']
  #allocation2 [shape = 'f32[128,128]{1,0:T(8,128)}', space=vmem, size = 0x10000, scoped, tag = 'scratch operand']
  %s0 = inlined_call_operand.vmem [shape: bf16[384,384], index: 0, kind: input, shape index: {}]
  %s1 = inlined_call_operand.vmem [shape: bf16[384,128], index: 1, kind: input, shape index: {}]
  %s2 = inlined_call_operand.vmem [shape: f32[384,128], index: 2, kind: output, shape index: {}]
  %s3 = sld [smem:[#allocation0]]
  $region90: #{_lambda_.5} parent=0
    _
  %s5 = ssub.s32 1, %s3
  %s6 = scalar_select 0, %s5, %s3
  $region1: #{_lambda_.5} parent=0
    #allocation3 [shape = 'u8[65536]{0}', space=vmem, size = 0x10000, scoped, tag = 'input window, operand 0']
    loop: start=0, step=1, limit=11
    $region2: #{_lambda_.5} parent=1 // loop_pre_header
      _
    $region3: #{_lambda_.5} parent=1 // loop_header
      %s8 = sphi 0, %s12
      %p9 = scmp.ge.s32.totalorder %s8, 11
      %s15 = sphi 0, %s27
      %s16 = sphi 0, %s23
      %s17 = sphi 0, %s15
      %s18 = sphi 0, %s16
      %s19 = sphi 0, %s17
      %s20 = sphi 0, %s18
      %s32 = sphi 0, %s34
      %s35 = sphi 0, %s32
      %s36 = sphi 0, %s35
      %s52 = sphi 0, %s36
      %s58 = sphi 0, %s60
      %s61 = sphi 0, %s58
      %s62 = sphi 0, %s61
      %s78 = sphi 0, %s62
      %s84 = sphi 0, %s86
      %s87 = sphi 0, %s84
      %s88 = sphi 0, %s87
      %s104 = sphi 0, %s88
    $region4: #{_lambda_.5} parent=1 // loop_header_branch
      %11 = sbr.rel (%p9) target = $region8
    $region5: #{_lambda_.5} parent=1 // loop_body
      %s13 = ssub.s32 %s8, 1
      %s14 = ssub.s32 %s8, 2
      %s21 = sadd.s32 1, %s16
      %p22 = scmp.ge.s32.totalorder %s21, 3
      %s23 = scalar_select %p22, 0, %s21
      %s24 = sadd.s32 1, %s15
      %s25 = scalar_select %p22, %s24, %s15
      %p26 = scmp.ge.s32.totalorder %s25, 3
      %s27 = scalar_select %p26, 0, %s25
      %s28 = ssub.s32 %s15, %s27
      %s29 = ssub.s32 %s16, %s23
      %s30 = sor.u32 %s28, %s29
      %p31 = scmp.eq.s32.totalorder %s30, 0
      %s33 = sadd.s32 %s32, 1
      %s34 = scalar_select %p31, %s32, %s33
      %p37 = pneg %p31
      %p38 = scmp.eq.s32.totalorder %s8, 8
      %p39 = por %p37, %p38
      %p40 = scmp.ne.s32.totalorder %s32, %s35
      %p41 = scmp.eq.s32.totalorder %s8, 0
      %p42 = por %p40, %p41
      %p43 = scmp.ne.s32.totalorder %s32, %s35
      %p44 = scmp.eq.s32.totalorder %s13, 8
      %p45 = por %p43, %p44
      %p46 = scmp.ne.s32.totalorder %s35, %s36
      %p47 = scmp.eq.s32.totalorder %s13, 0
      %p48 = por %p46, %p47
      %p49 = scmp.ne.s32.totalorder %s35, %s36
      %p50 = scmp.eq.s32.totalorder %s14, 8
      %p51 = por %p49, %p50
      %p53 = scmp.ne.s32.totalorder %s36, %s52
      %p54 = scmp.eq.s32.totalorder %s14, 0
      %p55 = por %p53, %p54
      %s56 = ssub.s32 %s16, %s23
      %p57 = scmp.eq.s32.totalorder %s56, 0
      %s59 = sadd.s32 %s58, 1
      %s60 = scalar_select %p57, %s58, %s59
      %p63 = pneg %p57
      %p64 = scmp.eq.s32.totalorder %s8, 8
      %p65 = por %p63, %p64
      %p66 = scmp.ne.s32.totalorder %s58, %s61
      %p67 = scmp.eq.s32.totalorder %s8, 0
      %p68 = por %p66, %p67
      %p69 = scmp.ne.s32.totalorder %s58, %s61
      %p70 = scmp.eq.s32.totalorder %s13, 8
      %p71 = por %p69, %p70
      %p72 = scmp.ne.s32.totalorder %s61, %s62
      %p73 = scmp.eq.s32.totalorder %s13, 0
      %p74 = por %p72, %p73
      %p75 = scmp.ne.s32.totalorder %s61, %s62
      %p76 = scmp.eq.s32.totalorder %s14, 8
      %p77 = por %p75, %p76
      %p79 = scmp.ne.s32.totalorder %s62, %s78
      %p80 = scmp.eq.s32.totalorder %s14, 0
      %p81 = por %p79, %p80
      %s82 = ssub.s32 %s15, %s27
      %p83 = scmp.eq.s32.totalorder %s82, 0
      %s85 = sadd.s32 %s84, 1
      %s86 = scalar_select %p83, %s84, %s85
      %p89 = pneg %p83
      %p90 = scmp.eq.s32.totalorder %s8, 8
      %p91 = por %p89, %p90
      %p92 = scmp.ne.s32.totalorder %s84, %s87
      %p93 = scmp.eq.s32.totalorder %s8, 0
      %p94 = por %p92, %p93
      %p95 = scmp.ne.s32.totalorder %s84, %s87
      %p96 = scmp.eq.s32.totalorder %s13, 8
      %p97 = por %p95, %p96
      %p98 = scmp.ne.s32.totalorder %s87, %s88
      %p99 = scmp.eq.s32.totalorder %s13, 0
      %p100 = por %p98, %p99
      %p101 = scmp.ne.s32.totalorder %s87, %s88
      %p102 = scmp.eq.s32.totalorder %s14, 8
      %p103 = por %p101, %p102
      %p105 = scmp.ne.s32.totalorder %s88, %s104
      %p106 = scmp.eq.s32.totalorder %s14, 0
      %p107 = por %p105, %p106
      %p108 = scmp.le.s32.totalorder 1, %s8
      %p109 = scmp.lt.s32.totalorder %s8, 10
      %p110 = pnand %p108, %p109
      %p111 = pneg %p110
      // Predicated region
      $region9: #{_lambda_.5} parent=5 // pred_check
        _
      $region10: #{_lambda_.5} parent=5 // pred_check_branch
        %113 = sbr.rel (%p110) target = $region12
      $region11: #{_lambda_.5} parent=5 // pred_region
        %s114 = ssub.s32 %s8, 1
      $region12: #{_lambda_.5} parent=5 // pred_fallthru
        _
      %p115 = scmp.lt.s32.totalorder %s8, 9
      // Predicated region
      $region13: #{_lambda_.5} parent=5 // pred_check
        %p116 = pneg %p115
      $region14: #{_lambda_.5} parent=5 // pred_check_branch
        %118 = sbr.rel (%p116) target = $region16
      $region15: #{_lambda_.5} parent=5 // pred_region
        // Predicated region
        $region17: #{_lambda_.5} parent=15 // pred_check
          %p119 = pneg %p42
        $region18: #{_lambda_.5} parent=15 // pred_check_branch
          %121 = sbr.rel (%p119) target = $region20
        $region19: #{_lambda_.5} parent=15 // pred_region
          %s122 = sand.u32 %s32, 1
          %s123 = sand.u32 %s32, 1
          %s124 = smul.addr %s123, 64
          %s125 = scalar_lea.vmem [#allocation3], %s124
          %s126 = smul.u32 16, %s15
          %s127 = smul.addr %s126, 3
          %s128 = sadd.s32 %s16, %s127
          %s129 = smul.addr %s128, 4
          %s130 = scalar_lea.vmem %s0, %s129
          // Predicated region
          $region21: #{_lambda_.5} parent=19 // pred_check
            _
          $region22: #{_lambda_.5} parent=19 // pred_check_branch
            %132 = sbr.rel (0) target = $region24
          $region23: #{_lambda_.5} parent=19 // pred_region
            // Predicated region
            $region25: #{_lambda_.5} parent=23 // pred_check
              _
            $region26: #{_lambda_.5} parent=23 // pred_check_branch
              %134 = sbr.rel target = $region28
            $region27: #{_lambda_.5} parent=23 // pred_region
              // Predicated region
              $region40: #{_lambda_.5} parent=27 // pred_check
                _
              $region41: #{_lambda_.5} parent=27 // pred_check_branch
                %180 = sbr.rel (0) target = $region43
              $region42: #{_lambda_.5} parent=27 // pred_region
                loop: start=0, step=1, limit=1
                $region44: #{_lambda_.5} parent=42 // loop_pre_header
                  _
                $region45: #{_lambda_.5} parent=42 // loop_header
                  %s182 = sphi 0, %s186
                  %p183 = scmp.ge.s32.totalorder %s182, 1
                  %s187 = sphi %s130, %s130
                  %s188 = sphi %s125, %s125
                $region46: #{_lambda_.5} parent=42 // loop_header_branch
                  %185 = sbr.rel (%p183) target = $region50
                $region47: #{_lambda_.5} parent=42 // loop_body
                  _
                $region48: #{_lambda_.5} parent=42 // loop_footer
                  %s186 = sadd.s32 1, %s182
                $region49: #{_lambda_.5} parent=42 // loop_footer_branch
                  %181 = sbr.rel target = $region45
                $region50: #{_lambda_.5} parent=42 // loop_exit
                  _
                %s190 = ssub.s32 16, 1
                loop: start=0, step=1, limit=1
                $region51: #{_lambda_.5} parent=42 // loop_pre_header
                  _
                $region52: #{_lambda_.5} parent=42 // loop_header
                  %s192 = sphi 0, %s196
                  %p193 = scmp.ge.s32.totalorder %s192, 1
                  %s197 = sphi %s130, %s130
                  %s198 = sphi %s125, %s125
                $region53: #{_lambda_.5} parent=42 // loop_header_branch
                  %195 = sbr.rel (%p193) target = $region57
                $region54: #{_lambda_.5} parent=42 // loop_body
                  %v199 = vld [vmem:[%s197] sm:%s190]
                  %200 = vst [vmem:[%s198] sm:%s190] %v199
                  %v201 = vld [vmem:[%s197 + $0xc] sm:%s190]
                  %202 = vst [vmem:[%s198 + $0x4] sm:%s190] %v201
                  %v203 = vld [vmem:[%s197 + $0x18] sm:%s190]
                  %204 = vst [vmem:[%s198 + $0x8] sm:%s190] %v203
                  %v205 = vld [vmem:[%s197 + $0x24] sm:%s190]
                  %206 = vst [vmem:[%s198 + $0xc] sm:%s190] %v205
                  %v207 = vld [vmem:[%s197 + $0x30] sm:%s190]
                  %208 = vst [vmem:[%s198 + $0x10] sm:%s190] %v207
                  %v209 = vld [vmem:[%s197 + $0x3c] sm:%s190]
                  %210 = vst [vmem:[%s198 + $0x14] sm:%s190] %v209
                  %v211 = vld [vmem:[%s197 + $0x48] sm:%s190]
                  %212 = vst [vmem:[%s198 + $0x18] sm:%s190] %v211
                  %v213 = vld [vmem:[%s197 + $0x54] sm:%s190]
                  %214 = vst [vmem:[%s198 + $0x1c] sm:%s190] %v213
                  %v215 = vld [vmem:[%s197 + $0x60] sm:%s190]
                  %216 = vst [vmem:[%s198 + $0x20] sm:%s190] %v215
                  %v217 = vld [vmem:[%s197 + $0x6c] sm:%s190]
                  %218 = vst [vmem:[%s198 + $0x24] sm:%s190] %v217
                  %v219 = vld [vmem:[%s197 + $0x78] sm:%s190]
                  %220 = vst [vmem:[%s198 + $0x28] sm:%s190] %v219
                  %v221 = vld [vmem:[%s197 + $0x84] sm:%s190]
                  %222 = vst [vmem:[%s198 + $0x2c] sm:%s190] %v221
                  %v223 = vld [vmem:[%s197 + $0x90] sm:%s190]
                  %224 = vst [vmem:[%s198 + $0x30] sm:%s190] %v223
                  %v225 = vld [vmem:[%s197 + $0x9c] sm:%s190]
                  %226 = vst [vmem:[%s198 + $0x34] sm:%s190] %v225
                  %v227 = vld [vmem:[%s197 + $0xa8] sm:%s190]
                  %228 = vst [vmem:[%s198 + $0x38] sm:%s190] %v227
                  %v229 = vld [vmem:[%s197 + $0xb4] sm:%s190]
                  %230 = vst [vmem:[%s198 + $0x3c] sm:%s190] %v229
                $region55: #{_lambda_.5} parent=42 // loop_footer
                  %s196 = sadd.s32 1, %s192
                $region56: #{_lambda_.5} parent=42 // loop_footer_branch
                  %191 = sbr.rel target = $region52
                $region57: #{_lambda_.5} parent=42 // loop_exit
                  _
              $region43: #{_lambda_.5} parent=27 // pred_fallthru
                _
            $region28: #{_lambda_.5} parent=23 // pred_fallthru
              _
            // Predicated region
            $region29: #{_lambda_.5} parent=23 // pred_check
              _
            $region30: #{_lambda_.5} parent=23 // pred_check_branch
              %136 = sbr.rel (0) target = $region32
            $region31: #{_lambda_.5} parent=23 // pred_region
              %s138 = ssub.s32 16, 1
              loop: start=0, step=1, limit=1
              $region33: #{_lambda_.5} parent=31 // loop_pre_header
                _
              $region34: #{_lambda_.5} parent=31 // loop_header
                %s140 = sphi 0, %s144
                %p141 = scmp.ge.s32.totalorder %s140, 1
                %s145 = sphi %s130, %s130
                %s146 = sphi %s125, %s125
              $region35: #{_lambda_.5} parent=31 // loop_header_branch
                %143 = sbr.rel (%p141) target = $region39
              $region36: #{_lambda_.5} parent=31 // loop_body
                %v147 = vld [vmem:[%s145] sm:%s138]
                %148 = vst [vmem:[%s146] sm:%s138] %v147
                %v149 = vld [vmem:[%s145 + $0xc] sm:%s138]
                %150 = vst [vmem:[%s146 + $0x4] sm:%s138] %v149
                %v151 = vld [vmem:[%s145 + $0x18] sm:%s138]
                %152 = vst [vmem:[%s146 + $0x8] sm:%s138] %v151
                %v153 = vld [vmem:[%s145 + $0x24] sm:%s138]
                %154 = vst [vmem:[%s146 + $0xc] sm:%s138] %v153
                %v155 = vld [vmem:[%s145 + $0x30] sm:%s138]
                %156 = vst [vmem:[%s146 + $0x10] sm:%s138] %v155
                %v157 = vld [vmem:[%s145 + $0x3c] sm:%s138]
                %158 = vst [vmem:[%s146 + $0x14] sm:%s138] %v157
                %v159 = vld [vmem:[%s145 + $0x48] sm:%s138]
                %160 = vst [vmem:[%s146 + $0x18] sm:%s138] %v159
                %v161 = vld [vmem:[%s145 + $0x54] sm:%s138]
                %162 = vst [vmem:[%s146 + $0x1c] sm:%s138] %v161
                %v163 = vld [vmem:[%s145 + $0x60] sm:%s138]
                %164 = vst [vmem:[%s146 + $0x20] sm:%s138] %v163
                %v165 = vld [vmem:[%s145 + $0x6c] sm:%s138]
                %166 = vst [vmem:[%s146 + $0x24] sm:%s138] %v165
                %v167 = vld [vmem:[%s145 + $0x78] sm:%s138]
                %168 = vst [vmem:[%s146 + $0x28] sm:%s138] %v167
                %v169 = vld [vmem:[%s145 + $0x84] sm:%s138]
                %170 = vst [vmem:[%s146 + $0x2c] sm:%s138] %v169
                %v171 = vld [vmem:[%s145 + $0x90] sm:%s138]
                %172 = vst [vmem:[%s146 + $0x30] sm:%s138] %v171
                %v173 = vld [vmem:[%s145 + $0x9c] sm:%s138]
                %174 = vst [vmem:[%s146 + $0x34] sm:%s138] %v173
                %v175 = vld [vmem:[%s145 + $0xa8] sm:%s138]
                %176 = vst [vmem:[%s146 + $0x38] sm:%s138] %v175
                %v177 = vld [vmem:[%s145 + $0xb4] sm:%s138]
                %178 = vst [vmem:[%s146 + $0x3c] sm:%s138] %v177
              $region37: #{_lambda_.5} parent=31 // loop_footer
                %s144 = sadd.s32 1, %s140
              $region38: #{_lambda_.5} parent=31 // loop_footer_branch
                %139 = sbr.rel target = $region34
              $region39: #{_lambda_.5} parent=31 // loop_exit
                _
            $region32: #{_lambda_.5} parent=23 // pred_fallthru
              _
          $region24: #{_lambda_.5} parent=19 // pred_fallthru
            _
          %231 = vnop
        $region20: #{_lambda_.5} parent=15 // pred_fallthru
          _
        // Predicated region
        $region58: #{_lambda_.5} parent=15 // pred_check
          %p232 = pneg %p68
        $region59: #{_lambda_.5} parent=15 // pred_check_branch
          %234 = sbr.rel (%p232) target = $region61
        $region60: #{_lambda_.5} parent=15 // pred_region
          %s235 = smul.u32 16, %s16
          %p236 = scmp.lt.s32.totalorder %s235, 47
          %s237 = scalar_select %p236, %s235, 47
          %s238 = smul.addr %s237, 4
          %s239 = scalar_lea.vmem %s1, %s238
          %s240 = smul.u32 16, %s16
        $region61: #{_lambda_.5} parent=15 // pred_fallthru
          _
      $region16: #{_lambda_.5} parent=5 // pred_fallthru
        _
      %p241 = scmp.le.s32.totalorder 1, %s8
      %p242 = scmp.lt.s32.totalorder %s8, 10
      %p243 = pnand %p241, %p242
      %p244 = pneg %p243
      // Predicated region
      $region62: #{_lambda_.5} parent=5 // pred_check
        _
      $region63: #{_lambda_.5} parent=5 // pred_check_branch
        %246 = sbr.rel (%p243) target = $region65
      $region64: #{_lambda_.5} parent=5 // pred_region
        %s247 = ssub.s32 %s8, 1
        %s248 = sand.u32 %s35, 1
        %s249 = sand.u32 %s35, 1
        %s250 = smul.addr %s249, 64
        %s251 = scalar_lea.vmem [#allocation3], %s250
        // Predicated region
        $region66: #{_lambda_.5} parent=64 // pred_check
          %p252 = pneg %p48
        $region67: #{_lambda_.5} parent=64 // pred_check_branch
          %254 = sbr.rel (%p252) target = $region69
        $region68: #{_lambda_.5} parent=64 // pred_region
          _
        $region69: #{_lambda_.5} parent=64 // pred_fallthru
          _
        %s255 = sand.u32 %s35, 1
        %s256 = sand.u32 %s35, 1
        %s257 = smul.addr %s256, 64
        %s258 = scalar_lea.vmem [#allocation3], %s257
        %p259 = pneg %p48
        %p260 = pneg %p45
        %s261 = smul.u32 16, %s18
        %p262 = scmp.lt.s32.totalorder %s261, 47
        %s263 = scalar_select %p262, %s261, 47
        %s264 = smul.addr %s263, 4
        %s265 = scalar_lea.vmem %s1, %s264
        %p266 = pneg %p74
        %p267 = pneg %p71
        %p268 = pneg %p100
        %p269 = pneg %p97
        %s270 = smul.u32 16, %s17
        %p271 = scmp.lt.s32.totalorder %s270, 47
        %s272 = scalar_select %p271, %s270, 47
        %s273 = smul.addr %s272, 8
        %s274 = scalar_lea.vmem %s2, %s273
        %s275 = smul.u32 16, %s17
        %s276 = smul.u32 16, %s18
        %p277 = scmp.lt.s32.totalorder %s276, 47
        %s278 = scalar_select %p277, %s276, 47
        %s279 = smul.addr %s278, 4
        %s280 = scalar_lea.vmem %s1, %s279
        %s281 = smul.u32 16, %s18
        %s282 = smul.u32 16, %s17
        %p283 = scmp.lt.s32.totalorder %s282, 47
        %s284 = scalar_select %p283, %s282, 47
        %s285 = smul.addr %s284, 8
        %s286 = scalar_lea.vmem %s2, %s285
        %s287 = smul.u32 16, %s17
        %p289 = scmp.eq.s32.totalorder %s18, 0
        // Predicated region
        $region70: #{_lambda_.5} parent=64 // pred_check
          %p290 = pneg %p289
        $region71: #{_lambda_.5} parent=64 // pred_check_branch
          %292 = sbr.rel (%p290) target = $region73
        $region72: #{_lambda_.5} parent=64 // pred_region
          %293 = vst [vmem:[#allocation2] sm:$0xff] 0.0
          %294 = vst [vmem:[#allocation2 + $0x8] sm:$0xff] 0.0
          %295 = vst [vmem:[#allocation2 + $0x10] sm:$0xff] 0.0
          %296 = vst [vmem:[#allocation2 + $0x18] sm:$0xff] 0.0
          %297 = vst [vmem:[#allocation2 + $0x20] sm:$0xff] 0.0
          %298 = vst [vmem:[#allocation2 + $0x28] sm:$0xff] 0.0
          %299 = vst [vmem:[#allocation2 + $0x30] sm:$0xff] 0.0
          %300 = vst [vmem:[#allocation2 + $0x38] sm:$0xff] 0.0
          %301 = vst [vmem:[#allocation2 + $0x40] sm:$0xff] 0.0
          %302 = vst [vmem:[#allocation2 + $0x48] sm:$0xff] 0.0
          %303 = vst [vmem:[#allocation2 + $0x50] sm:$0xff] 0.0
          %304 = vst [vmem:[#allocation2 + $0x58] sm:$0xff] 0.0
          %305 = vst [vmem:[#allocation2 + $0x60] sm:$0xff] 0.0
          %306 = vst [vmem:[#allocation2 + $0x68] sm:$0xff] 0.0
          %307 = vst [vmem:[#allocation2 + $0x70] sm:$0xff] 0.0
          %308 = vst [vmem:[#allocation2 + $0x78] sm:$0xff] 0.0
        $region73: #{_lambda_.5} parent=64 // pred_fallthru
          _
        %v309 = vld [vmem:[#allocation2] sm:$0xff]
        %v310 = vld [vmem:[#allocation2 + $0x8] sm:$0xff]
        %v311 = vld [vmem:[#allocation2 + $0x10] sm:$0xff]
        %v312 = vld [vmem:[#allocation2 + $0x18] sm:$0xff]
        %v313 = vld [vmem:[#allocation2 + $0x20] sm:$0xff]
        %v314 = vld [vmem:[#allocation2 + $0x28] sm:$0xff]
        %v315 = vld [vmem:[#allocation2 + $0x30] sm:$0xff]
        %v316 = vld [vmem:[#allocation2 + $0x38] sm:$0xff]
        %v317 = vld [vmem:[#allocation2 + $0x40] sm:$0xff]
        %v318 = vld [vmem:[#allocation2 + $0x48] sm:$0xff]
        %v319 = vld [vmem:[#allocation2 + $0x50] sm:$0xff]
        %v320 = vld [vmem:[#allocation2 + $0x58] sm:$0xff]
        %v321 = vld [vmem:[#allocation2 + $0x60] sm:$0xff]
        %v322 = vld [vmem:[#allocation2 + $0x68] sm:$0xff]
        %v323 = vld [vmem:[#allocation2 + $0x70] sm:$0xff]
        %v324 = vld [vmem:[#allocation2 + $0x78] sm:$0xff]
        %v325 = vld [vmem:[%s251] sm:$0xf]
        %v326 = vld [vmem:[%s251 + $0x4] sm:$0xf]
        %v327 = vld [vmem:[%s251 + $0x8] sm:$0xf]
        %v328 = vld [vmem:[%s251 + $0xc] sm:$0xf]
        %v329 = vld [vmem:[%s251 + $0x10] sm:$0xf]
        %v330 = vld [vmem:[%s251 + $0x14] sm:$0xf]
        %v331 = vld [vmem:[%s251 + $0x18] sm:$0xf]
        %v332 = vld [vmem:[%s251 + $0x1c] sm:$0xf]
        %v333 = vld [vmem:[%s251 + $0x20] sm:$0xf]
        %v334 = vld [vmem:[%s251 + $0x24] sm:$0xf]
        %v335 = vld [vmem:[%s251 + $0x28] sm:$0xf]
        %v336 = vld [vmem:[%s251 + $0x2c] sm:$0xf]
        %v337 = vld [vmem:[%s251 + $0x30] sm:$0xf]
        %v338 = vld [vmem:[%s251 + $0x34] sm:$0xf]
        %v339 = vld [vmem:[%s251 + $0x38] sm:$0xf]
        %v340 = vld [vmem:[%s251 + $0x3c] sm:$0xf]
        %v341 = vld [vmem:[%s280] sm:$0xf]
        %v342 = vld [vmem:[%s280 + $0x4] sm:$0xf]
        %v343 = vld [vmem:[%s280 + $0x8] sm:$0xf]
        %v344 = vld [vmem:[%s280 + $0xc] sm:$0xf]
        %v345 = vld [vmem:[%s280 + $0x10] sm:$0xf]
        %v346 = vld [vmem:[%s280 + $0x14] sm:$0xf]
        %v347 = vld [vmem:[%s280 + $0x18] sm:$0xf]
        %v348 = vld [vmem:[%s280 + $0x1c] sm:$0xf]
        %v349 = vld [vmem:[%s280 + $0x20] sm:$0xf]
        %v350 = vld [vmem:[%s280 + $0x24] sm:$0xf]
        %v351 = vld [vmem:[%s280 + $0x28] sm:$0xf]
        %v352 = vld [vmem:[%s280 + $0x2c] sm:$0xf]
        %v353 = vld [vmem:[%s280 + $0x30] sm:$0xf]
        %v354 = vld [vmem:[%s280 + $0x34] sm:$0xf]
        %v355 = vld [vmem:[%s280 + $0x38] sm:$0xf]
        %v356 = vld [vmem:[%s280 + $0x3c] sm:$0xf]
        %v373 = vunpack.c.l.b16 %v325
        %v374 = vunpack.c.l.b16 %v326
        %v375 = vunpack.c.l.b16 %v327
        %v376 = vunpack.c.l.b16 %v328
        %v377 = vunpack.c.l.b16 %v329
        %v378 = vunpack.c.l.b16 %v330
        %v379 = vunpack.c.l.b16 %v331
        %v380 = vunpack.c.l.b16 %v332
        %v381 = vunpack.c.l.b16 %v333
        %v382 = vunpack.c.l.b16 %v334
        %v383 = vunpack.c.l.b16 %v335
        %v384 = vunpack.c.l.b16 %v336
        %v385 = vunpack.c.l.b16 %v337
        %v386 = vunpack.c.l.b16 %v338
        %v387 = vunpack.c.l.b16 %v339
        %v388 = vunpack.c.l.b16 %v340
        %v389 = vpack.c.b16 %v374, %v373
        %v390 = vpack.c.b16 %v376, %v375
        %v391 = vpack.c.b16 %v378, %v377
        %v392 = vpack.c.b16 %v380, %v379
        %v393 = vpack.c.b16 %v382, %v381
        %v394 = vpack.c.b16 %v384, %v383
        %v395 = vpack.c.b16 %v386, %v385
        %v396 = vpack.c.b16 %v388, %v387
        %v421 = vunpack.c.l.b16 %v341
        %v422 = vunpack.c.l.b16 %v342
        %v423 = vunpack.c.l.b16 %v343
        %v424 = vunpack.c.l.b16 %v344
        %v425 = vunpack.c.l.b16 %v345
        %v426 = vunpack.c.l.b16 %v346
        %v427 = vunpack.c.l.b16 %v347
        %v428 = vunpack.c.l.b16 %v348
        %v429 = vunpack.c.l.b16 %v349
        %v430 = vunpack.c.l.b16 %v350
        %v431 = vunpack.c.l.b16 %v351
        %v432 = vunpack.c.l.b16 %v352
        %v433 = vunpack.c.l.b16 %v353
        %v434 = vunpack.c.l.b16 %v354
        %v435 = vunpack.c.l.b16 %v355
        %v436 = vunpack.c.l.b16 %v356
        %v437 = vpack.c.b16 %v422, %v421
        %v438 = vpack.c.b16 %v424, %v423
        %v439 = vpack.c.b16 %v426, %v425
        %v440 = vpack.c.b16 %v428, %v427
        %v441 = vpack.c.b16 %v430, %v429
        %v442 = vpack.c.b16 %v432, %v431
        %v443 = vpack.c.b16 %v434, %v433
        %v444 = vpack.c.b16 %v436, %v435
        %453 = vmatprep.subr.bf16.mxu0 0
        %454 = vmatpush1.bf16.msra.mxu0 %v444
        %455 = vmatprep.subr.bf16.mxu0 0
        %456 = vmatpush1.bf16.msra.mxu0 %v443
        %457 = vmatprep.subr.bf16.mxu0 0
        %458 = vmatpush1.bf16.msra.mxu0 %v442
        %459 = vmatprep.subr.bf16.mxu0 0
        %460 = vmatpush1.bf16.msra.mxu0 %v441
        %461 = vmatprep.subr.bf16.mxu0 0
        %462 = vmatpush1.bf16.msra.mxu0 %v440
        %463 = vmatprep.subr.bf16.mxu0 0
        %464 = vmatpush1.bf16.msra.mxu0 %v439
        %465 = vmatprep.subr.bf16.mxu0 0
        %466 = vmatpush1.bf16.msra.mxu0 %v438
        %467 = vmatprep.subr.bf16.mxu0 0
        %468 = vmatpush1.bf16.msra.mxu0 %v437
        %469 = vmatprep.subr.bf16.mxu0 0
        %470 = vmatpush2.bf16.msra.mxu0 0
        %471 = vmatprep.subr.bf16.mxu0 0
        %472 = vmatpush2.bf16.msra.mxu0 0
        %473 = vmatprep.subr.bf16.mxu0 0
        %474 = vmatpush2.bf16.msra.mxu0 0
        %475 = vmatprep.subr.bf16.mxu0 0
        %476 = vmatpush2.bf16.msra.mxu0 0
        %477 = vmatprep.subr.bf16.mxu0 0
        %478 = vmatpush2.bf16.msra.mxu0 0
        %479 = vmatprep.subr.bf16.mxu0 0
        %480 = vmatpush2.bf16.msra.mxu0 0
        %481 = vmatprep.subr.bf16.mxu0 0
        %482 = vmatpush2.bf16.msra.mxu0 0
        %483 = vmatprep.subr.bf16.mxu0 0
        %484 = vmatpush2.bf16.msra.mxu0 0
        %485 = vmatprep.mubr.bf16.mxu0 0
        %486 = vmatmul.mubr.bf16.gmra.mxu0 %v389
        %v487 = vpop.f32.mrf.mxu0
        %v488 = vadd.f32 0.0, %v487
        %v489 = vpop.f32.mrf.mxu0
        %v490 = vpop.f32.mrf.mxu0
        %v491 = vadd.f32 0.0, %v490
        %v492 = vpop.f32.mrf.mxu0
        %493 = vmatprep.mubr.bf16.mxu0 0
        %494 = vmatmul.mubr.bf16.gmra.mxu0 %v390
        %v495 = vpop.f32.mrf.mxu0
        %v496 = vadd.f32 0.0, %v495
        %v497 = vpop.f32.mrf.mxu0
        %v498 = vpop.f32.mrf.mxu0
        %v499 = vadd.f32 0.0, %v498
        %v500 = vpop.f32.mrf.mxu0
        %501 = vmatprep.mubr.bf16.mxu0 0
        %502 = vmatmul.mubr.bf16.gmra.mxu0 %v391
        %v503 = vpop.f32.mrf.mxu0
        %v504 = vadd.f32 0.0, %v503
        %v505 = vpop.f32.mrf.mxu0
        %v506 = vpop.f32.mrf.mxu0
        %v507 = vadd.f32 0.0, %v506
        %v508 = vpop.f32.mrf.mxu0
        %509 = vmatprep.mubr.bf16.mxu0 0
        %510 = vmatmul.mubr.bf16.gmra.mxu0 %v392
        %v511 = vpop.f32.mrf.mxu0
        %v512 = vadd.f32 0.0, %v511
        %v513 = vpop.f32.mrf.mxu0
        %v514 = vpop.f32.mrf.mxu0
        %v515 = vadd.f32 0.0, %v514
        %v516 = vpop.f32.mrf.mxu0
        %517 = vmatprep.mubr.bf16.mxu0 0
        %518 = vmatmul.mubr.bf16.gmra.mxu0 %v393
        %v519 = vpop.f32.mrf.mxu0
        %v520 = vadd.f32 0.0, %v519
        %v521 = vpop.f32.mrf.mxu0
        %v522 = vpop.f32.mrf.mxu0
        %v523 = vadd.f32 0.0, %v522
        %v524 = vpop.f32.mrf.mxu0
        %525 = vmatprep.mubr.bf16.mxu0 0
        %526 = vmatmul.mubr.bf16.gmra.mxu0 %v394
        %v527 = vpop.f32.mrf.mxu0
        %v528 = vadd.f32 0.0, %v527
        %v529 = vpop.f32.mrf.mxu0
        %v530 = vpop.f32.mrf.mxu0
        %v531 = vadd.f32 0.0, %v530
        %v532 = vpop.f32.mrf.mxu0
        %533 = vmatprep.mubr.bf16.mxu0 0
        %534 = vmatmul.mubr.bf16.gmra.mxu0 %v395
        %v535 = vpop.f32.mrf.mxu0
        %v536 = vadd.f32 0.0, %v535
        %v537 = vpop.f32.mrf.mxu0
        %v538 = vpop.f32.mrf.mxu0
        %v539 = vadd.f32 0.0, %v538
        %v540 = vpop.f32.mrf.mxu0
        %541 = vmatprep.mubr.bf16.mxu0 0
        %542 = vmatmul.mubr.bf16.gmra.mxu0 %v396
        %v543 = vpop.f32.mrf.mxu0
        %v544 = vadd.f32 0.0, %v543
        %v545 = vpop.f32.mrf.mxu0
        %v546 = vpop.f32.mrf.mxu0
        %v547 = vadd.f32 0.0, %v546
        %v548 = vpop.f32.mrf.mxu0
        %549 = vdwg.mxu0
        %v550 = vadd.f32 %v309, %v488
        %v551 = vadd.f32 %v310, %v491
        %v552 = vadd.f32 %v311, %v496
        %v553 = vadd.f32 %v312, %v499
        %v554 = vadd.f32 %v313, %v504
        %v555 = vadd.f32 %v314, %v507
        %v556 = vadd.f32 %v315, %v512
        %v557 = vadd.f32 %v316, %v515
        %v558 = vadd.f32 %v317, %v520
        %v559 = vadd.f32 %v318, %v523
        %v560 = vadd.f32 %v319, %v528
        %v561 = vadd.f32 %v320, %v531
        %v562 = vadd.f32 %v321, %v536
        %v563 = vadd.f32 %v322, %v539
        %v564 = vadd.f32 %v323, %v544
        %v565 = vadd.f32 %v324, %v547
        %566 = vst [vmem:[#allocation2] sm:$0xff] %v550
        %567 = vst [vmem:[#allocation2 + $0x8] sm:$0xff] %v551
        %568 = vst [vmem:[#allocation2 + $0x10] sm:$0xff] %v552
        %569 = vst [vmem:[#allocation2 + $0x18] sm:$0xff] %v553
        %570 = vst [vmem:[#allocation2 + $0x20] sm:$0xff] %v554
        %571 = vst [vmem:[#allocation2 + $0x28] sm:$0xff] %v555
        %572 = vst [vmem:[#allocation2 + $0x30] sm:$0xff] %v556
        %573 = vst [vmem:[#allocation2 + $0x38] sm:$0xff] %v557
        %574 = vst [vmem:[#allocation2 + $0x40] sm:$0xff] %v558
        %575 = vst [vmem:[#allocation2 + $0x48] sm:$0xff] %v559
        %576 = vst [vmem:[#allocation2 + $0x50] sm:$0xff] %v560
        %577 = vst [vmem:[#allocation2 + $0x58] sm:$0xff] %v561
        %578 = vst [vmem:[#allocation2 + $0x60] sm:$0xff] %v562
        %579 = vst [vmem:[#allocation2 + $0x68] sm:$0xff] %v563
        %580 = vst [vmem:[#allocation2 + $0x70] sm:$0xff] %v564
        %581 = vst [vmem:[#allocation2 + $0x78] sm:$0xff] %v565
        %p582 = scmp.eq.s32.totalorder %s18, 2
        // Predicated region
        $region74: #{_lambda_.5} parent=64 // pred_check
          %p583 = pneg %p582
        $region75: #{_lambda_.5} parent=64 // pred_check_branch
          %585 = sbr.rel (%p583) target = $region77
        $region76: #{_lambda_.5} parent=64 // pred_region
          %v586 = vld [vmem:[#allocation2] sm:$0xff]
          %v587 = vld [vmem:[#allocation2 + $0x8] sm:$0xff]
          %v588 = vld [vmem:[#allocation2 + $0x10] sm:$0xff]
          %v589 = vld [vmem:[#allocation2 + $0x18] sm:$0xff]
          %v590 = vld [vmem:[#allocation2 + $0x20] sm:$0xff]
          %v591 = vld [vmem:[#allocation2 + $0x28] sm:$0xff]
          %v592 = vld [vmem:[#allocation2 + $0x30] sm:$0xff]
          %v593 = vld [vmem:[#allocation2 + $0x38] sm:$0xff]
          %v594 = vld [vmem:[#allocation2 + $0x40] sm:$0xff]
          %v595 = vld [vmem:[#allocation2 + $0x48] sm:$0xff]
          %v596 = vld [vmem:[#allocation2 + $0x50] sm:$0xff]
          %v597 = vld [vmem:[#allocation2 + $0x58] sm:$0xff]
          %v598 = vld [vmem:[#allocation2 + $0x60] sm:$0xff]
          %v599 = vld [vmem:[#allocation2 + $0x68] sm:$0xff]
          %v600 = vld [vmem:[#allocation2 + $0x70] sm:$0xff]
          %v601 = vld [vmem:[#allocation2 + $0x78] sm:$0xff]
          %602 = vst [vmem:[%s286] sm:$0xff] %v586
          %603 = vst [vmem:[%s286 + $0x8] sm:$0xff] %v587
          %604 = vst [vmem:[%s286 + $0x10] sm:$0xff] %v588
          %605 = vst [vmem:[%s286 + $0x18] sm:$0xff] %v589
          %606 = vst [vmem:[%s286 + $0x20] sm:$0xff] %v590
          %607 = vst [vmem:[%s286 + $0x28] sm:$0xff] %v591
          %608 = vst [vmem:[%s286 + $0x30] sm:$0xff] %v592
          %609 = vst [vmem:[%s286 + $0x38] sm:$0xff] %v593
          %610 = vst [vmem:[%s286 + $0x40] sm:$0xff] %v594
          %611 = vst [vmem:[%s286 + $0x48] sm:$0xff] %v595
          %612 = vst [vmem:[%s286 + $0x50] sm:$0xff] %v596
          %613 = vst [vmem:[%s286 + $0x58] sm:$0xff] %v597
          %614 = vst [vmem:[%s286 + $0x60] sm:$0xff] %v598
          %615 = vst [vmem:[%s286 + $0x68] sm:$0xff] %v599
          %616 = vst [vmem:[%s286 + $0x70] sm:$0xff] %v600
          %617 = vst [vmem:[%s286 + $0x78] sm:$0xff] %v601
        $region77: #{_lambda_.5} parent=64 // pred_fallthru
          _
        %s618 = smul.u32 16, %s17
        %p619 = scmp.lt.s32.totalorder %s618, 47
        %s620 = scalar_select %p619, %s618, 47
        %s621 = smul.addr %s620, 8
        %s622 = scalar_lea.vmem %s2, %s621
        // Predicated region
        $region78: #{_lambda_.5} parent=64 // pred_check
          %p623 = pneg %p97
        $region79: #{_lambda_.5} parent=64 // pred_check_branch
          %625 = sbr.rel (%p623) target = $region81
        $region80: #{_lambda_.5} parent=64 // pred_region
          %s626 = smul.u32 16, %s17
        $region81: #{_lambda_.5} parent=64 // pred_fallthru
          _
      $region65: #{_lambda_.5} parent=5 // pred_fallthru
        _
      %p627 = scmp.le.s32.totalorder 2, %s8
      // Predicated region
      $region82: #{_lambda_.5} parent=5 // pred_check
        %p628 = pneg %p627
      $region83: #{_lambda_.5} parent=5 // pred_check_branch
        %630 = sbr.rel (%p628) target = $region85
      $region84: #{_lambda_.5} parent=5 // pred_region
        %s631 = ssub.s32 %s8, 2
        // Predicated region
        $region86: #{_lambda_.5} parent=84 // pred_check
          %p632 = pneg %p103
        $region87: #{_lambda_.5} parent=84 // pred_check_branch
          %634 = sbr.rel (%p632) target = $region89
        $region88: #{_lambda_.5} parent=84 // pred_region
          %s635 = smul.u32 16, %s19
          %p636 = scmp.lt.s32.totalorder %s635, 47
          %s637 = scalar_select %p636, %s635, 47
          %s638 = smul.addr %s637, 8
          %s639 = scalar_lea.vmem %s2, %s638
        $region89: #{_lambda_.5} parent=84 // pred_fallthru
          _
      $region85: #{_lambda_.5} parent=5 // pred_fallthru
        _
    $region6: #{_lambda_.5} parent=1 // loop_footer
      %s12 = sadd.s32 1, %s8
    $region7: #{_lambda_.5} parent=1 // loop_footer_branch
      %7 = sbr.rel target = $region3
    $region8: #{_lambda_.5} parent=1 // loop_exit
      _

// kernel: _lambda_.4
$region0: #{_lambda_.4}
  #allocation0 [shape = 'u32[]', space=smem, size = 0x4, offset = 0x4, fixed_abs, tag = 'smem constant byte address 0x4 - core index']
  #allocation1 [shape = 'u32[144,128]{1,0:T(1,128)}', space=vmem, size = 0x12000, scoped, tag = 'internal scratch']
  #allocation2 [shape = 'f32[128,128]{1,0:T(8,128)}', space=vmem, size = 0x10000, scoped, tag = 'scratch operand']
  %s0 = inlined_call_operand.vmem [shape: bf16[384,384], index: 0, kind: input, shape index: {}]
  %s1 = inlined_call_operand.vmem [shape: bf16[384,128], index: 1, kind: input, shape index: {}]
  %s2 = inlined_call_operand.vmem [shape: bf16[128,128], index: 2, kind: input, shape index: {}]
  %s3 = inlined_call_operand.vmem [shape: bf16[384,128], index: 3, kind: output, shape index: {}]
  %s4 = sld [smem:[#allocation0]]
  $region94: #{_lambda_.4} parent=0
    _
  %s6 = ssub.s32 1, %s4
  %s7 = scalar_select 0, %s6, %s4
  $region1: #{_lambda_.4} parent=0
    #allocation3 [shape = 'u8[65536]{0}', space=vmem, size = 0x10000, scoped, tag = 'input window, operand 0']
    loop: start=0, step=1, limit=11
    $region2: #{_lambda_.4} parent=1 // loop_pre_header
      _
    $region3: #{_lambda_.4} parent=1 // loop_header
      %s9 = sphi 0, %s13
      %p10 = scmp.ge.s32.totalorder %s9, 11
      %s16 = sphi 0, %s28
      %s17 = sphi 0, %s24
      %s18 = sphi 0, %s16
      %s19 = sphi 0, %s17
      %s20 = sphi 0, %s18
      %s21 = sphi 0, %s19
      %s33 = sphi 0, %s35
      %s36 = sphi 0, %s33
      %s37 = sphi 0, %s36
      %s53 = sphi 0, %s37
      %s59 = sphi 0, %s61
      %s62 = sphi 0, %s59
      %s63 = sphi 0, %s62
      %s79 = sphi 0, %s63
      %s83 = sphi 0, %s83
      %s85 = sphi 0, %s83
      %s86 = sphi 0, %s85
      %s100 = sphi 0, %s86
      %s106 = sphi 0, %s108
      %s109 = sphi 0, %s106
      %s110 = sphi 0, %s109
      %s126 = sphi 0, %s110
    $region4: #{_lambda_.4} parent=1 // loop_header_branch
      %12 = sbr.rel (%p10) target = $region8
    $region5: #{_lambda_.4} parent=1 // loop_body
      %s14 = ssub.s32 %s9, 1
      %s15 = ssub.s32 %s9, 2
      %s22 = sadd.s32 1, %s17
      %p23 = scmp.ge.s32.totalorder %s22, 3
      %s24 = scalar_select %p23, 0, %s22
      %s25 = sadd.s32 1, %s16
      %s26 = scalar_select %p23, %s25, %s16
      %p27 = scmp.ge.s32.totalorder %s26, 3
      %s28 = scalar_select %p27, 0, %s26
      %s29 = ssub.s32 %s16, %s28
      %s30 = ssub.s32 %s17, %s24
      %s31 = sor.u32 %s29, %s30
      %p32 = scmp.eq.s32.totalorder %s31, 0
      %s34 = sadd.s32 %s33, 1
      %s35 = scalar_select %p32, %s33, %s34
      %p38 = pneg %p32
      %p39 = scmp.eq.s32.totalorder %s9, 8
      %p40 = por %p38, %p39
      %p41 = scmp.ne.s32.totalorder %s33, %s36
      %p42 = scmp.eq.s32.totalorder %s9, 0
      %p43 = por %p41, %p42
      %p44 = scmp.ne.s32.totalorder %s33, %s36
      %p45 = scmp.eq.s32.totalorder %s14, 8
      %p46 = por %p44, %p45
      %p47 = scmp.ne.s32.totalorder %s36, %s37
      %p48 = scmp.eq.s32.totalorder %s14, 0
      %p49 = por %p47, %p48
      %p50 = scmp.ne.s32.totalorder %s36, %s37
      %p51 = scmp.eq.s32.totalorder %s15, 8
      %p52 = por %p50, %p51
      %p54 = scmp.ne.s32.totalorder %s37, %s53
      %p55 = scmp.eq.s32.totalorder %s15, 0
      %p56 = por %p54, %p55
      %s57 = ssub.s32 %s17, %s24
      %p58 = scmp.eq.s32.totalorder %s57, 0
      %s60 = sadd.s32 %s59, 1
      %s61 = scalar_select %p58, %s59, %s60
      %p64 = pneg %p58
      %p65 = scmp.eq.s32.totalorder %s9, 8
      %p66 = por %p64, %p65
      %p67 = scmp.ne.s32.totalorder %s59, %s62
      %p68 = scmp.eq.s32.totalorder %s9, 0
      %p69 = por %p67, %p68
      %p70 = scmp.ne.s32.totalorder %s59, %s62
      %p71 = scmp.eq.s32.totalorder %s14, 8
      %p72 = por %p70, %p71
      %p73 = scmp.ne.s32.totalorder %s62, %s63
      %p74 = scmp.eq.s32.totalorder %s14, 0
      %p75 = por %p73, %p74
      %p76 = scmp.ne.s32.totalorder %s62, %s63
      %p77 = scmp.eq.s32.totalorder %s15, 8
      %p78 = por %p76, %p77
      %p80 = scmp.ne.s32.totalorder %s63, %s79
      %p81 = scmp.eq.s32.totalorder %s15, 0
      %p82 = por %p80, %p81
      %s84 = sadd.s32 %s83, 1
      %p87 = scmp.eq.s32.totalorder %s9, 8
      %p88 = scmp.ne.s32.totalorder %s83, %s85
      %p89 = scmp.eq.s32.totalorder %s9, 0
      %p90 = por %p88, %p89
      %p91 = scmp.ne.s32.totalorder %s83, %s85
      %p92 = scmp.eq.s32.totalorder %s14, 8
      %p93 = por %p91, %p92
      %p94 = scmp.ne.s32.totalorder %s85, %s86
      %p95 = scmp.eq.s32.totalorder %s14, 0
      %p96 = por %p94, %p95
      %p97 = scmp.ne.s32.totalorder %s85, %s86
      %p98 = scmp.eq.s32.totalorder %s15, 8
      %p99 = por %p97, %p98
      %p101 = scmp.ne.s32.totalorder %s86, %s100
      %p102 = scmp.eq.s32.totalorder %s15, 0
      %p103 = por %p101, %p102
      %s104 = ssub.s32 %s16, %s28
      %p105 = scmp.eq.s32.totalorder %s104, 0
      %s107 = sadd.s32 %s106, 1
      %s108 = scalar_select %p105, %s106, %s107
      %p111 = pneg %p105
      %p112 = scmp.eq.s32.totalorder %s9, 8
      %p113 = por %p111, %p112
      %p114 = scmp.ne.s32.totalorder %s106, %s109
      %p115 = scmp.eq.s32.totalorder %s9, 0
      %p116 = por %p114, %p115
      %p117 = scmp.ne.s32.totalorder %s106, %s109
      %p118 = scmp.eq.s32.totalorder %s14, 8
      %p119 = por %p117, %p118
      %p120 = scmp.ne.s32.totalorder %s109, %s110
      %p121 = scmp.eq.s32.totalorder %s14, 0
      %p122 = por %p120, %p121
      %p123 = scmp.ne.s32.totalorder %s109, %s110
      %p124 = scmp.eq.s32.totalorder %s15, 8
      %p125 = por %p123, %p124
      %p127 = scmp.ne.s32.totalorder %s110, %s126
      %p128 = scmp.eq.s32.totalorder %s15, 0
      %p129 = por %p127, %p128
      %p130 = scmp.le.s32.totalorder 1, %s9
      %p131 = scmp.lt.s32.totalorder %s9, 10
      %p132 = pnand %p130, %p131
      %p133 = pneg %p132
      // Predicated region
      $region9: #{_lambda_.4} parent=5 // pred_check
        _
      $region10: #{_lambda_.4} parent=5 // pred_check_branch
        %135 = sbr.rel (%p132) target = $region12
      $region11: #{_lambda_.4} parent=5 // pred_region
        %s136 = ssub.s32 %s9, 1
        // Predicated region
        $region13: #{_lambda_.4} parent=11 // pred_check
          %p137 = pneg %p96
        $region14: #{_lambda_.4} parent=11 // pred_check_branch
          %139 = sbr.rel (%p137) target = $region16
        $region15: #{_lambda_.4} parent=11 // pred_region
          _
        $region16: #{_lambda_.4} parent=11 // pred_fallthru
          _
      $region12: #{_lambda_.4} parent=5 // pred_fallthru
        _
      %p140 = scmp.lt.s32.totalorder %s9, 9
      // Predicated region
      $region17: #{_lambda_.4} parent=5 // pred_check
        %p141 = pneg %p140
      $region18: #{_lambda_.4} parent=5 // pred_check_branch
        %143 = sbr.rel (%p141) target = $region20
      $region19: #{_lambda_.4} parent=5 // pred_region
        // Predicated region
        $region21: #{_lambda_.4} parent=19 // pred_check
          %p144 = pneg %p43
        $region22: #{_lambda_.4} parent=19 // pred_check_branch
          %146 = sbr.rel (%p144) target = $region24
        $region23: #{_lambda_.4} parent=19 // pred_region
          %s147 = sand.u32 %s33, 1
          %s148 = sand.u32 %s33, 1
          %s149 = smul.addr %s148, 64
          %s150 = scalar_lea.vmem [#allocation3], %s149
          %s151 = smul.u32 16, %s16
          %s152 = smul.addr %s151, 3
          %s153 = sadd.s32 %s17, %s152
          %s154 = smul.addr %s153, 4
          %s155 = scalar_lea.vmem %s0, %s154
          // Predicated region
          $region25: #{_lambda_.4} parent=23 // pred_check
            _
          $region26: #{_lambda_.4} parent=23 // pred_check_branch
            %157 = sbr.rel (0) target = $region28
          $region27: #{_lambda_.4} parent=23 // pred_region
            // Predicated region
            $region29: #{_lambda_.4} parent=27 // pred_check
              _
            $region30: #{_lambda_.4} parent=27 // pred_check_branch
              %159 = sbr.rel target = $region32
            $region31: #{_lambda_.4} parent=27 // pred_region
              // Predicated region
              $region44: #{_lambda_.4} parent=31 // pred_check
                _
              $region45: #{_lambda_.4} parent=31 // pred_check_branch
                %205 = sbr.rel (0) target = $region47
              $region46: #{_lambda_.4} parent=31 // pred_region
                loop: start=0, step=1, limit=1
                $region48: #{_lambda_.4} parent=46 // loop_pre_header
                  _
                $region49: #{_lambda_.4} parent=46 // loop_header
                  %s207 = sphi 0, %s211
                  %p208 = scmp.ge.s32.totalorder %s207, 1
                  %s212 = sphi %s155, %s155
                  %s213 = sphi %s150, %s150
                $region50: #{_lambda_.4} parent=46 // loop_header_branch
                  %210 = sbr.rel (%p208) target = $region54
                $region51: #{_lambda_.4} parent=46 // loop_body
                  _
                $region52: #{_lambda_.4} parent=46 // loop_footer
                  %s211 = sadd.s32 1, %s207
                $region53: #{_lambda_.4} parent=46 // loop_footer_branch
                  %206 = sbr.rel target = $region49
                $region54: #{_lambda_.4} parent=46 // loop_exit
                  _
                %s215 = ssub.s32 16, 1
                loop: start=0, step=1, limit=1
                $region55: #{_lambda_.4} parent=46 // loop_pre_header
                  _
                $region56: #{_lambda_.4} parent=46 // loop_header
                  %s217 = sphi 0, %s221
                  %p218 = scmp.ge.s32.totalorder %s217, 1
                  %s222 = sphi %s155, %s155
                  %s223 = sphi %s150, %s150
                $region57: #{_lambda_.4} parent=46 // loop_header_branch
                  %220 = sbr.rel (%p218) target = $region61
                $region58: #{_lambda_.4} parent=46 // loop_body
                  %v224 = vld [vmem:[%s222] sm:%s215]
                  %225 = vst [vmem:[%s223] sm:%s215] %v224
                  %v226 = vld [vmem:[%s222 + $0xc] sm:%s215]
                  %227 = vst [vmem:[%s223 + $0x4] sm:%s215] %v226
                  %v228 = vld [vmem:[%s222 + $0x18] sm:%s215]
                  %229 = vst [vmem:[%s223 + $0x8] sm:%s215] %v228
                  %v230 = vld [vmem:[%s222 + $0x24] sm:%s215]
                  %231 = vst [vmem:[%s223 + $0xc] sm:%s215] %v230
                  %v232 = vld [vmem:[%s222 + $0x30] sm:%s215]
                  %233 = vst [vmem:[%s223 + $0x10] sm:%s215] %v232
                  %v234 = vld [vmem:[%s222 + $0x3c] sm:%s215]
                  %235 = vst [vmem:[%s223 + $0x14] sm:%s215] %v234
                  %v236 = vld [vmem:[%s222 + $0x48] sm:%s215]
                  %237 = vst [vmem:[%s223 + $0x18] sm:%s215] %v236
                  %v238 = vld [vmem:[%s222 + $0x54] sm:%s215]
                  %239 = vst [vmem:[%s223 + $0x1c] sm:%s215] %v238
                  %v240 = vld [vmem:[%s222 + $0x60] sm:%s215]
                  %241 = vst [vmem:[%s223 + $0x20] sm:%s215] %v240
                  %v242 = vld [vmem:[%s222 + $0x6c] sm:%s215]
                  %243 = vst [vmem:[%s223 + $0x24] sm:%s215] %v242
                  %v244 = vld [vmem:[%s222 + $0x78] sm:%s215]
                  %245 = vst [vmem:[%s223 + $0x28] sm:%s215] %v244
                  %v246 = vld [vmem:[%s222 + $0x84] sm:%s215]
                  %247 = vst [vmem:[%s223 + $0x2c] sm:%s215] %v246
                  %v248 = vld [vmem:[%s222 + $0x90] sm:%s215]
                  %249 = vst [vmem:[%s223 + $0x30] sm:%s215] %v248
                  %v250 = vld [vmem:[%s222 + $0x9c] sm:%s215]
                  %251 = vst [vmem:[%s223 + $0x34] sm:%s215] %v250
                  %v252 = vld [vmem:[%s222 + $0xa8] sm:%s215]
                  %253 = vst [vmem:[%s223 + $0x38] sm:%s215] %v252
                  %v254 = vld [vmem:[%s222 + $0xb4] sm:%s215]
                  %255 = vst [vmem:[%s223 + $0x3c] sm:%s215] %v254
                $region59: #{_lambda_.4} parent=46 // loop_footer
                  %s221 = sadd.s32 1, %s217
                $region60: #{_lambda_.4} parent=46 // loop_footer_branch
                  %216 = sbr.rel target = $region56
                $region61: #{_lambda_.4} parent=46 // loop_exit
                  _
              $region47: #{_lambda_.4} parent=31 // pred_fallthru
                _
            $region32: #{_lambda_.4} parent=27 // pred_fallthru
              _
            // Predicated region
            $region33: #{_lambda_.4} parent=27 // pred_check
              _
            $region34: #{_lambda_.4} parent=27 // pred_check_branch
              %161 = sbr.rel (0) target = $region36
            $region35: #{_lambda_.4} parent=27 // pred_region
              %s163 = ssub.s32 16, 1
              loop: start=0, step=1, limit=1
              $region37: #{_lambda_.4} parent=35 // loop_pre_header
                _
              $region38: #{_lambda_.4} parent=35 // loop_header
                %s165 = sphi 0, %s169
                %p166 = scmp.ge.s32.totalorder %s165, 1
                %s170 = sphi %s155, %s155
                %s171 = sphi %s150, %s150
              $region39: #{_lambda_.4} parent=35 // loop_header_branch
                %168 = sbr.rel (%p166) target = $region43
              $region40: #{_lambda_.4} parent=35 // loop_body
                %v172 = vld [vmem:[%s170] sm:%s163]
                %173 = vst [vmem:[%s171] sm:%s163] %v172
                %v174 = vld [vmem:[%s170 + $0xc] sm:%s163]
                %175 = vst [vmem:[%s171 + $0x4] sm:%s163] %v174
                %v176 = vld [vmem:[%s170 + $0x18] sm:%s163]
                %177 = vst [vmem:[%s171 + $0x8] sm:%s163] %v176
                %v178 = vld [vmem:[%s170 + $0x24] sm:%s163]
                %179 = vst [vmem:[%s171 + $0xc] sm:%s163] %v178
                %v180 = vld [vmem:[%s170 + $0x30] sm:%s163]
                %181 = vst [vmem:[%s171 + $0x10] sm:%s163] %v180
                %v182 = vld [vmem:[%s170 + $0x3c] sm:%s163]
                %183 = vst [vmem:[%s171 + $0x14] sm:%s163] %v182
                %v184 = vld [vmem:[%s170 + $0x48] sm:%s163]
                %185 = vst [vmem:[%s171 + $0x18] sm:%s163] %v184
                %v186 = vld [vmem:[%s170 + $0x54] sm:%s163]
                %187 = vst [vmem:[%s171 + $0x1c] sm:%s163] %v186
                %v188 = vld [vmem:[%s170 + $0x60] sm:%s163]
                %189 = vst [vmem:[%s171 + $0x20] sm:%s163] %v188
                %v190 = vld [vmem:[%s170 + $0x6c] sm:%s163]
                %191 = vst [vmem:[%s171 + $0x24] sm:%s163] %v190
                %v192 = vld [vmem:[%s170 + $0x78] sm:%s163]
                %193 = vst [vmem:[%s171 + $0x28] sm:%s163] %v192
                %v194 = vld [vmem:[%s170 + $0x84] sm:%s163]
                %195 = vst [vmem:[%s171 + $0x2c] sm:%s163] %v194
                %v196 = vld [vmem:[%s170 + $0x90] sm:%s163]
                %197 = vst [vmem:[%s171 + $0x30] sm:%s163] %v196
                %v198 = vld [vmem:[%s170 + $0x9c] sm:%s163]
                %199 = vst [vmem:[%s171 + $0x34] sm:%s163] %v198
                %v200 = vld [vmem:[%s170 + $0xa8] sm:%s163]
                %201 = vst [vmem:[%s171 + $0x38] sm:%s163] %v200
                %v202 = vld [vmem:[%s170 + $0xb4] sm:%s163]
                %203 = vst [vmem:[%s171 + $0x3c] sm:%s163] %v202
              $region41: #{_lambda_.4} parent=35 // loop_footer
                %s169 = sadd.s32 1, %s165
              $region42: #{_lambda_.4} parent=35 // loop_footer_branch
                %164 = sbr.rel target = $region38
              $region43: #{_lambda_.4} parent=35 // loop_exit
                _
            $region36: #{_lambda_.4} parent=27 // pred_fallthru
              _
          $region28: #{_lambda_.4} parent=23 // pred_fallthru
            _
          %256 = vnop
        $region24: #{_lambda_.4} parent=19 // pred_fallthru
          _
        // Predicated region
        $region62: #{_lambda_.4} parent=19 // pred_check
          %p257 = pneg %p69
        $region63: #{_lambda_.4} parent=19 // pred_check_branch
          %259 = sbr.rel (%p257) target = $region65
        $region64: #{_lambda_.4} parent=19 // pred_region
          %s260 = smul.u32 16, %s17
          %p261 = scmp.lt.s32.totalorder %s260, 47
          %s262 = scalar_select %p261, %s260, 47
          %s263 = smul.addr %s262, 4
          %s264 = scalar_lea.vmem %s1, %s263
          %s265 = smul.u32 16, %s17
        $region65: #{_lambda_.4} parent=19 // pred_fallthru
          _
      $region20: #{_lambda_.4} parent=5 // pred_fallthru
        _
      %p266 = scmp.le.s32.totalorder 1, %s9
      %p267 = scmp.lt.s32.totalorder %s9, 10
      %p268 = pnand %p266, %p267
      %p269 = pneg %p268
      // Predicated region
      $region66: #{_lambda_.4} parent=5 // pred_check
        _
      $region67: #{_lambda_.4} parent=5 // pred_check_branch
        %271 = sbr.rel (%p268) target = $region69
      $region68: #{_lambda_.4} parent=5 // pred_region
        %s272 = ssub.s32 %s9, 1
        %s273 = sand.u32 %s36, 1
        %s274 = sand.u32 %s36, 1
        %s275 = smul.addr %s274, 64
        %s276 = scalar_lea.vmem [#allocation3], %s275
        // Predicated region
        $region70: #{_lambda_.4} parent=68 // pred_check
          %p277 = pneg %p49
        $region71: #{_lambda_.4} parent=68 // pred_check_branch
          %279 = sbr.rel (%p277) target = $region73
        $region72: #{_lambda_.4} parent=68 // pred_region
          _
        $region73: #{_lambda_.4} parent=68 // pred_fallthru
          _
        %s280 = sand.u32 %s36, 1
        %s281 = sand.u32 %s36, 1
        %s282 = smul.addr %s281, 64
        %s283 = scalar_lea.vmem [#allocation3], %s282
        %p284 = pneg %p49
        %p285 = pneg %p46
        %s286 = smul.u32 16, %s19
        %p287 = scmp.lt.s32.totalorder %s286, 47
        %s288 = scalar_select %p287, %s286, 47
        %s289 = smul.addr %s288, 4
        %s290 = scalar_lea.vmem %s1, %s289
        %p291 = pneg %p75
        %p292 = pneg %p72
        %p293 = pneg %p96
        %p294 = pneg %p93
        %p295 = pneg %p122
        %p296 = pneg %p119
        %s297 = smul.u32 16, %s18
        %p298 = scmp.lt.s32.totalorder %s297, 47
        %s299 = scalar_select %p298, %s297, 47
        %s300 = smul.addr %s299, 4
        %s301 = scalar_lea.vmem %s3, %s300
        %s302 = smul.u32 16, %s18
        %s303 = smul.u32 16, %s19
        %p304 = scmp.lt.s32.totalorder %s303, 47
        %s305 = scalar_select %p304, %s303, 47
        %s306 = smul.addr %s305, 4
        %s307 = scalar_lea.vmem %s1, %s306
        %s308 = smul.u32 16, %s19
        %s309 = smul.u32 16, %s18
        %p310 = scmp.lt.s32.totalorder %s309, 47
        %s311 = scalar_select %p310, %s309, 47
        %s312 = smul.addr %s311, 4
        %s313 = scalar_lea.vmem %s3, %s312
        %s314 = smul.u32 16, %s18
        %p316 = scmp.eq.s32.totalorder %s19, 0
        // Predicated region
        $region74: #{_lambda_.4} parent=68 // pred_check
          %p317 = pneg %p316
        $region75: #{_lambda_.4} parent=68 // pred_check_branch
          %319 = sbr.rel (%p317) target = $region77
        $region76: #{_lambda_.4} parent=68 // pred_region
          %320 = vst [vmem:[#allocation2] sm:$0xff] 0.0
          %321 = vst [vmem:[#allocation2 + $0x8] sm:$0xff] 0.0
          %322 = vst [vmem:[#allocation2 + $0x10] sm:$0xff] 0.0
          %323 = vst [vmem:[#allocation2 + $0x18] sm:$0xff] 0.0
          %324 = vst [vmem:[#allocation2 + $0x20] sm:$0xff] 0.0
          %325 = vst [vmem:[#allocation2 + $0x28] sm:$0xff] 0.0
          %326 = vst [vmem:[#allocation2 + $0x30] sm:$0xff] 0.0
          %327 = vst [vmem:[#allocation2 + $0x38] sm:$0xff] 0.0
          %328 = vst [vmem:[#allocation2 + $0x40] sm:$0xff] 0.0
          %329 = vst [vmem:[#allocation2 + $0x48] sm:$0xff] 0.0
          %330 = vst [vmem:[#allocation2 + $0x50] sm:$0xff] 0.0
          %331 = vst [vmem:[#allocation2 + $0x58] sm:$0xff] 0.0
          %332 = vst [vmem:[#allocation2 + $0x60] sm:$0xff] 0.0
          %333 = vst [vmem:[#allocation2 + $0x68] sm:$0xff] 0.0
          %334 = vst [vmem:[#allocation2 + $0x70] sm:$0xff] 0.0
          %335 = vst [vmem:[#allocation2 + $0x78] sm:$0xff] 0.0
        $region77: #{_lambda_.4} parent=68 // pred_fallthru
          _
        %v336 = vld [vmem:[#allocation2] sm:$0xff]
        %v337 = vld [vmem:[#allocation2 + $0x8] sm:$0xff]
        %v338 = vld [vmem:[#allocation2 + $0x10] sm:$0xff]
        %v339 = vld [vmem:[#allocation2 + $0x18] sm:$0xff]
        %v340 = vld [vmem:[#allocation2 + $0x20] sm:$0xff]
        %v341 = vld [vmem:[#allocation2 + $0x28] sm:$0xff]
        %v342 = vld [vmem:[#allocation2 + $0x30] sm:$0xff]
        %v343 = vld [vmem:[#allocation2 + $0x38] sm:$0xff]
        %v344 = vld [vmem:[#allocation2 + $0x40] sm:$0xff]
        %v345 = vld [vmem:[#allocation2 + $0x48] sm:$0xff]
        %v346 = vld [vmem:[#allocation2 + $0x50] sm:$0xff]
        %v347 = vld [vmem:[#allocation2 + $0x58] sm:$0xff]
        %v348 = vld [vmem:[#allocation2 + $0x60] sm:$0xff]
        %v349 = vld [vmem:[#allocation2 + $0x68] sm:$0xff]
        %v350 = vld [vmem:[#allocation2 + $0x70] sm:$0xff]
        %v351 = vld [vmem:[#allocation2 + $0x78] sm:$0xff]
        %v352 = vld [vmem:[%s276] sm:$0xf]
        %v353 = vld [vmem:[%s276 + $0x4] sm:$0xf]
        %v354 = vld [vmem:[%s276 + $0x8] sm:$0xf]
        %v355 = vld [vmem:[%s276 + $0xc] sm:$0xf]
        %v356 = vld [vmem:[%s276 + $0x10] sm:$0xf]
        %v357 = vld [vmem:[%s276 + $0x14] sm:$0xf]
        %v358 = vld [vmem:[%s276 + $0x18] sm:$0xf]
        %v359 = vld [vmem:[%s276 + $0x1c] sm:$0xf]
        %v360 = vld [vmem:[%s276 + $0x20] sm:$0xf]
        %v361 = vld [vmem:[%s276 + $0x24] sm:$0xf]
        %v362 = vld [vmem:[%s276 + $0x28] sm:$0xf]
        %v363 = vld [vmem:[%s276 + $0x2c] sm:$0xf]
        %v364 = vld [vmem:[%s276 + $0x30] sm:$0xf]
        %v365 = vld [vmem:[%s276 + $0x34] sm:$0xf]
        %v366 = vld [vmem:[%s276 + $0x38] sm:$0xf]
        %v367 = vld [vmem:[%s276 + $0x3c] sm:$0xf]
        %v368 = vld [vmem:[%s307] sm:$0xf]
        %v369 = vld [vmem:[%s307 + $0x4] sm:$0xf]
        %v370 = vld [vmem:[%s307 + $0x8] sm:$0xf]
        %v371 = vld [vmem:[%s307 + $0xc] sm:$0xf]
        %v372 = vld [vmem:[%s307 + $0x10] sm:$0xf]
        %v373 = vld [vmem:[%s307 + $0x14] sm:$0xf]
        %v374 = vld [vmem:[%s307 + $0x18] sm:$0xf]
        %v375 = vld [vmem:[%s307 + $0x1c] sm:$0xf]
        %v376 = vld [vmem:[%s307 + $0x20] sm:$0xf]
        %v377 = vld [vmem:[%s307 + $0x24] sm:$0xf]
        %v378 = vld [vmem:[%s307 + $0x28] sm:$0xf]
        %v379 = vld [vmem:[%s307 + $0x2c] sm:$0xf]
        %v380 = vld [vmem:[%s307 + $0x30] sm:$0xf]
        %v381 = vld [vmem:[%s307 + $0x34] sm:$0xf]
        %v382 = vld [vmem:[%s307 + $0x38] sm:$0xf]
        %v383 = vld [vmem:[%s307 + $0x3c] sm:$0xf]
        %v400 = vunpack.c.l.b16 %v352
        %v401 = vunpack.c.l.b16 %v353
        %v402 = vunpack.c.l.b16 %v354
        %v403 = vunpack.c.l.b16 %v355
        %v404 = vunpack.c.l.b16 %v356
        %v405 = vunpack.c.l.b16 %v357
        %v406 = vunpack.c.l.b16 %v358
        %v407 = vunpack.c.l.b16 %v359
        %v408 = vunpack.c.l.b16 %v360
        %v409 = vunpack.c.l.b16 %v361
        %v410 = vunpack.c.l.b16 %v362
        %v411 = vunpack.c.l.b16 %v363
        %v412 = vunpack.c.l.b16 %v364
        %v413 = vunpack.c.l.b16 %v365
        %v414 = vunpack.c.l.b16 %v366
        %v415 = vunpack.c.l.b16 %v367
        %v416 = vpack.c.b16 %v401, %v400
        %v417 = vpack.c.b16 %v403, %v402
        %v418 = vpack.c.b16 %v405, %v404
        %v419 = vpack.c.b16 %v407, %v406
        %v420 = vpack.c.b16 %v409, %v408
        %v421 = vpack.c.b16 %v411, %v410
        %v422 = vpack.c.b16 %v413, %v412
        %v423 = vpack.c.b16 %v415, %v414
        %v448 = vunpack.c.l.b16 %v368
        %v449 = vunpack.c.l.b16 %v369
        %v450 = vunpack.c.l.b16 %v370
        %v451 = vunpack.c.l.b16 %v371
        %v452 = vunpack.c.l.b16 %v372
        %v453 = vunpack.c.l.b16 %v373
        %v454 = vunpack.c.l.b16 %v374
        %v455 = vunpack.c.l.b16 %v375
        %v456 = vunpack.c.l.b16 %v376
        %v457 = vunpack.c.l.b16 %v377
        %v458 = vunpack.c.l.b16 %v378
        %v459 = vunpack.c.l.b16 %v379
        %v460 = vunpack.c.l.b16 %v380
        %v461 = vunpack.c.l.b16 %v381
        %v462 = vunpack.c.l.b16 %v382
        %v463 = vunpack.c.l.b16 %v383
        %v464 = vpack.c.b16 %v449, %v448
        %v465 = vpack.c.b16 %v451, %v450
        %v466 = vpack.c.b16 %v453, %v452
        %v467 = vpack.c.b16 %v455, %v454
        %v468 = vpack.c.b16 %v457, %v456
        %v469 = vpack.c.b16 %v459, %v458
        %v470 = vpack.c.b16 %v461, %v460
        %v471 = vpack.c.b16 %v463, %v462
        %480 = vmatprep.subr.bf16.mxu0 0
        %481 = vmatpush1.bf16.msra.mxu0 %v471
        %482 = vmatprep.subr.bf16.mxu0 0
        %483 = vmatpush1.bf16.msra.mxu0 %v470
        %484 = vmatprep.subr.bf16.mxu0 0
        %485 = vmatpush1.bf16.msra.mxu0 %v469
        %486 = vmatprep.subr.bf16.mxu0 0
        %487 = vmatpush1.bf16.msra.mxu0 %v468
        %488 = vmatprep.subr.bf16.mxu0 0
        %489 = vmatpush1.bf16.msra.mxu0 %v467
        %490 = vmatprep.subr.bf16.mxu0 0
        %491 = vmatpush1.bf16.msra.mxu0 %v466
        %492 = vmatprep.subr.bf16.mxu0 0
        %493 = vmatpush1.bf16.msra.mxu0 %v465
        %494 = vmatprep.subr.bf16.mxu0 0
        %495 = vmatpush1.bf16.msra.mxu0 %v464
        %496 = vmatprep.subr.bf16.mxu0 0
        %497 = vmatpush2.bf16.msra.mxu0 0
        %498 = vmatprep.subr.bf16.mxu0 0
        %499 = vmatpush2.bf16.msra.mxu0 0
        %500 = vmatprep.subr.bf16.mxu0 0
        %501 = vmatpush2.bf16.msra.mxu0 0
        %502 = vmatprep.subr.bf16.mxu0 0
        %503 = vmatpush2.bf16.msra.mxu0 0
        %504 = vmatprep.subr.bf16.mxu0 0
        %505 = vmatpush2.bf16.msra.mxu0 0
        %506 = vmatprep.subr.bf16.mxu0 0
        %507 = vmatpush2.bf16.msra.mxu0 0
        %508 = vmatprep.subr.bf16.mxu0 0
        %509 = vmatpush2.bf16.msra.mxu0 0
        %510 = vmatprep.subr.bf16.mxu0 0
        %511 = vmatpush2.bf16.msra.mxu0 0
        %512 = vmatprep.mubr.bf16.mxu0 0
        %513 = vmatmul.mubr.bf16.gmra.mxu0 %v416
        %v514 = vpop.f32.mrf.mxu0
        %v515 = vadd.f32 0.0, %v514
        %v516 = vpop.f32.mrf.mxu0
        %v517 = vpop.f32.mrf.mxu0
        %v518 = vadd.f32 0.0, %v517
        %v519 = vpop.f32.mrf.mxu0
        %520 = vmatprep.mubr.bf16.mxu0 0
        %521 = vmatmul.mubr.bf16.gmra.mxu0 %v417
        %v522 = vpop.f32.mrf.mxu0
        %v523 = vadd.f32 0.0, %v522
        %v524 = vpop.f32.mrf.mxu0
        %v525 = vpop.f32.mrf.mxu0
        %v526 = vadd.f32 0.0, %v525
        %v527 = vpop.f32.mrf.mxu0
        %528 = vmatprep.mubr.bf16.mxu0 0
        %529 = vmatmul.mubr.bf16.gmra.mxu0 %v418
        %v530 = vpop.f32.mrf.mxu0
        %v531 = vadd.f32 0.0, %v530
        %v532 = vpop.f32.mrf.mxu0
        %v533 = vpop.f32.mrf.mxu0
        %v534 = vadd.f32 0.0, %v533
        %v535 = vpop.f32.mrf.mxu0
        %536 = vmatprep.mubr.bf16.mxu0 0
        %537 = vmatmul.mubr.bf16.gmra.mxu0 %v419
        %v538 = vpop.f32.mrf.mxu0
        %v539 = vadd.f32 0.0, %v538
        %v540 = vpop.f32.mrf.mxu0
        %v541 = vpop.f32.mrf.mxu0
        %v542 = vadd.f32 0.0, %v541
        %v543 = vpop.f32.mrf.mxu0
        %544 = vmatprep.mubr.bf16.mxu0 0
        %545 = vmatmul.mubr.bf16.gmra.mxu0 %v420
        %v546 = vpop.f32.mrf.mxu0
        %v547 = vadd.f32 0.0, %v546
        %v548 = vpop.f32.mrf.mxu0
        %v549 = vpop.f32.mrf.mxu0
        %v550 = vadd.f32 0.0, %v549
        %v551 = vpop.f32.mrf.mxu0
        %552 = vmatprep.mubr.bf16.mxu0 0
        %553 = vmatmul.mubr.bf16.gmra.mxu0 %v421
        %v554 = vpop.f32.mrf.mxu0
        %v555 = vadd.f32 0.0, %v554
        %v556 = vpop.f32.mrf.mxu0
        %v557 = vpop.f32.mrf.mxu0
        %v558 = vadd.f32 0.0, %v557
        %v559 = vpop.f32.mrf.mxu0
        %560 = vmatprep.mubr.bf16.mxu0 0
        %561 = vmatmul.mubr.bf16.gmra.mxu0 %v422
        %v562 = vpop.f32.mrf.mxu0
        %v563 = vadd.f32 0.0, %v562
        %v564 = vpop.f32.mrf.mxu0
        %v565 = vpop.f32.mrf.mxu0
        %v566 = vadd.f32 0.0, %v565
        %v567 = vpop.f32.mrf.mxu0
        %568 = vmatprep.mubr.bf16.mxu0 0
        %569 = vmatmul.mubr.bf16.gmra.mxu0 %v423
        %v570 = vpop.f32.mrf.mxu0
        %v571 = vadd.f32 0.0, %v570
        %v572 = vpop.f32.mrf.mxu0
        %v573 = vpop.f32.mrf.mxu0
        %v574 = vadd.f32 0.0, %v573
        %v575 = vpop.f32.mrf.mxu0
        %576 = vdwg.mxu0
        %v577 = vadd.f32 %v336, %v515
        %v578 = vadd.f32 %v337, %v518
        %v579 = vadd.f32 %v338, %v523
        %v580 = vadd.f32 %v339, %v526
        %v581 = vadd.f32 %v340, %v531
        %v582 = vadd.f32 %v341, %v534
        %v583 = vadd.f32 %v342, %v539
        %v584 = vadd.f32 %v343, %v542
        %v585 = vadd.f32 %v344, %v547
        %v586 = vadd.f32 %v345, %v550
        %v587 = vadd.f32 %v346, %v555
        %v588 = vadd.f32 %v347, %v558
        %v589 = vadd.f32 %v348, %v563
        %v590 = vadd.f32 %v349, %v566
        %v591 = vadd.f32 %v350, %v571
        %v592 = vadd.f32 %v351, %v574
        %593 = vst [vmem:[#allocation2] sm:$0xff] %v577
        %594 = vst [vmem:[#allocation2 + $0x8] sm:$0xff] %v578
        %595 = vst [vmem:[#allocation2 + $0x10] sm:$0xff] %v579
        %596 = vst [vmem:[#allocation2 + $0x18] sm:$0xff] %v580
        %597 = vst [vmem:[#allocation2 + $0x20] sm:$0xff] %v581
        %598 = vst [vmem:[#allocation2 + $0x28] sm:$0xff] %v582
        %599 = vst [vmem:[#allocation2 + $0x30] sm:$0xff] %v583
        %600 = vst [vmem:[#allocation2 + $0x38] sm:$0xff] %v584
        %601 = vst [vmem:[#allocation2 + $0x40] sm:$0xff] %v585
        %602 = vst [vmem:[#allocation2 + $0x48] sm:$0xff] %v586
        %603 = vst [vmem:[#allocation2 + $0x50] sm:$0xff] %v587
        %604 = vst [vmem:[#allocation2 + $0x58] sm:$0xff] %v588
        %605 = vst [vmem:[#allocation2 + $0x60] sm:$0xff] %v589
        %606 = vst [vmem:[#allocation2 + $0x68] sm:$0xff] %v590
        %607 = vst [vmem:[#allocation2 + $0x70] sm:$0xff] %v591
        %608 = vst [vmem:[#allocation2 + $0x78] sm:$0xff] %v592
        %p609 = scmp.eq.s32.totalorder %s19, 2
        // Predicated region
        $region78: #{_lambda_.4} parent=68 // pred_check
          %p610 = pneg %p609
        $region79: #{_lambda_.4} parent=68 // pred_check_branch
          %612 = sbr.rel (%p610) target = $region81
        $region80: #{_lambda_.4} parent=68 // pred_region
          %v613 = vld [vmem:[#allocation2] sm:$0xff]
          %v614 = vld [vmem:[#allocation2 + $0x8] sm:$0xff]
          %v615 = vld [vmem:[#allocation2 + $0x10] sm:$0xff]
          %v616 = vld [vmem:[#allocation2 + $0x18] sm:$0xff]
          %v617 = vld [vmem:[#allocation2 + $0x20] sm:$0xff]
          %v618 = vld [vmem:[#allocation2 + $0x28] sm:$0xff]
          %v619 = vld [vmem:[#allocation2 + $0x30] sm:$0xff]
          %v620 = vld [vmem:[#allocation2 + $0x38] sm:$0xff]
          %v621 = vld [vmem:[#allocation2 + $0x40] sm:$0xff]
          %v622 = vld [vmem:[#allocation2 + $0x48] sm:$0xff]
          %v623 = vld [vmem:[#allocation2 + $0x50] sm:$0xff]
          %v624 = vld [vmem:[#allocation2 + $0x58] sm:$0xff]
          %v625 = vld [vmem:[#allocation2 + $0x60] sm:$0xff]
          %v626 = vld [vmem:[#allocation2 + $0x68] sm:$0xff]
          %v627 = vld [vmem:[#allocation2 + $0x70] sm:$0xff]
          %v628 = vld [vmem:[#allocation2 + $0x78] sm:$0xff]
          %v629 = vmax.f32 %v613, 0.0
          %v630 = vmax.f32 %v614, 0.0
          %v631 = vmax.f32 %v615, 0.0
          %v632 = vmax.f32 %v616, 0.0
          %v633 = vmax.f32 %v617, 0.0
          %v634 = vmax.f32 %v618, 0.0
          %v635 = vmax.f32 %v619, 0.0
          %v636 = vmax.f32 %v620, 0.0
          %v637 = vmax.f32 %v621, 0.0
          %v638 = vmax.f32 %v622, 0.0
          %v639 = vmax.f32 %v623, 0.0
          %v640 = vmax.f32 %v624, 0.0
          %v641 = vmax.f32 %v625, 0.0
          %v642 = vmax.f32 %v626, 0.0
          %v643 = vmax.f32 %v627, 0.0
          %v644 = vmax.f32 %v628, 0.0
          %v645 = vpack.c.bf16 %v630, %v629
          %v646 = vpack.c.bf16 %v632, %v631
          %v647 = vpack.c.bf16 %v634, %v633
          %v648 = vpack.c.bf16 %v636, %v635
          %v649 = vpack.c.bf16 %v638, %v637
          %v650 = vpack.c.bf16 %v640, %v639
          %v651 = vpack.c.bf16 %v642, %v641
          %v652 = vpack.c.bf16 %v644, %v643
          %v653 = vld [vmem:[%s2] sm:$0xf]
          %v654 = vld [vmem:[%s2 + $0x4] sm:$0xf]
          %v655 = vld [vmem:[%s2 + $0x8] sm:$0xf]
          %v656 = vld [vmem:[%s2 + $0xc] sm:$0xf]
          %v657 = vld [vmem:[%s2 + $0x10] sm:$0xf]
          %v658 = vld [vmem:[%s2 + $0x14] sm:$0xf]
          %v659 = vld [vmem:[%s2 + $0x18] sm:$0xf]
          %v660 = vld [vmem:[%s2 + $0x1c] sm:$0xf]
          %v661 = vld [vmem:[%s2 + $0x20] sm:$0xf]
          %v662 = vld [vmem:[%s2 + $0x24] sm:$0xf]
          %v663 = vld [vmem:[%s2 + $0x28] sm:$0xf]
          %v664 = vld [vmem:[%s2 + $0x2c] sm:$0xf]
          %v665 = vld [vmem:[%s2 + $0x30] sm:$0xf]
          %v666 = vld [vmem:[%s2 + $0x34] sm:$0xf]
          %v667 = vld [vmem:[%s2 + $0x38] sm:$0xf]
          %v668 = vld [vmem:[%s2 + $0x3c] sm:$0xf]
          %v685 = vunpack.c.l.b16 %v653
          %v686 = vunpack.c.l.b16 %v654
          %v687 = vunpack.c.l.b16 %v655
          %v688 = vunpack.c.l.b16 %v656
          %v689 = vunpack.c.l.b16 %v657
          %v690 = vunpack.c.l.b16 %v658
          %v691 = vunpack.c.l.b16 %v659
          %v692 = vunpack.c.l.b16 %v660
          %v693 = vunpack.c.l.b16 %v661
          %v694 = vunpack.c.l.b16 %v662
          %v695 = vunpack.c.l.b16 %v663
          %v696 = vunpack.c.l.b16 %v664
          %v697 = vunpack.c.l.b16 %v665
          %v698 = vunpack.c.l.b16 %v666
          %v699 = vunpack.c.l.b16 %v667
          %v700 = vunpack.c.l.b16 %v668
          %v701 = vpack.c.b16 %v686, %v685
          %v702 = vpack.c.b16 %v688, %v687
          %v703 = vpack.c.b16 %v690, %v689
          %v704 = vpack.c.b16 %v692, %v691
          %v705 = vpack.c.b16 %v694, %v693
          %v706 = vpack.c.b16 %v696, %v695
          %v707 = vpack.c.b16 %v698, %v697
          %v708 = vpack.c.b16 %v700, %v699
          %717 = vmatprep.subr.bf16.mxu0 0
          %718 = vmatpush1.bf16.msra.mxu0 %v708
          %719 = vmatprep.subr.bf16.mxu0 0
          %720 = vmatpush1.bf16.msra.mxu0 %v707
          %721 = vmatprep.subr.bf16.mxu0 0
          %722 = vmatpush1.bf16.msra.mxu0 %v706
          %723 = vmatprep.subr.bf16.mxu0 0
          %724 = vmatpush1.bf16.msra.mxu0 %v705
          %725 = vmatprep.subr.bf16.mxu0 0
          %726 = vmatpush1.bf16.msra.mxu0 %v704
          %727 = vmatprep.subr.bf16.mxu0 0
          %728 = vmatpush1.bf16.msra.mxu0 %v703
          %729 = vmatprep.subr.bf16.mxu0 0
          %730 = vmatpush1.bf16.msra.mxu0 %v702
          %731 = vmatprep.subr.bf16.mxu0 0
          %732 = vmatpush1.bf16.msra.mxu0 %v701
          %733 = vmatprep.subr.bf16.mxu0 0
          %734 = vmatpush2.bf16.msra.mxu0 0
          %735 = vmatprep.subr.bf16.mxu0 0
          %736 = vmatpush2.bf16.msra.mxu0 0
          %737 = vmatprep.subr.bf16.mxu0 0
          %738 = vmatpush2.bf16.msra.mxu0 0
          %739 = vmatprep.subr.bf16.mxu0 0
          %740 = vmatpush2.bf16.msra.mxu0 0
          %741 = vmatprep.subr.bf16.mxu0 0
          %742 = vmatpush2.bf16.msra.mxu0 0
          %743 = vmatprep.subr.bf16.mxu0 0
          %744 = vmatpush2.bf16.msra.mxu0 0
          %745 = vmatprep.subr.bf16.mxu0 0
          %746 = vmatpush2.bf16.msra.mxu0 0
          %747 = vmatprep.subr.bf16.mxu0 0
          %748 = vmatpush2.bf16.msra.mxu0 0
          %749 = vmatprep.mubr.bf16.mxu0 0
          %750 = vmatmul.mubr.bf16.gmra.mxu0 %v645
          %v751 = vpop.f32.mrf.mxu0
          %v752 = vadd.f32 0.0, %v751
          %v753 = vpop.f32.mrf.mxu0
          %v754 = vpop.f32.mrf.mxu0
          %v755 = vadd.f32 0.0, %v754
          %v756 = vpop.f32.mrf.mxu0
          %757 = vmatprep.mubr.bf16.mxu0 0
          %758 = vmatmul.mubr.bf16.gmra.mxu0 %v646
          %v759 = vpop.f32.mrf.mxu0
          %v760 = vadd.f32 0.0, %v759
          %v761 = vpop.f32.mrf.mxu0
          %v762 = vpop.f32.mrf.mxu0
          %v763 = vadd.f32 0.0, %v762
          %v764 = vpop.f32.mrf.mxu0
          %765 = vmatprep.mubr.bf16.mxu0 0
          %766 = vmatmul.mubr.bf16.gmra.mxu0 %v647
          %v767 = vpop.f32.mrf.mxu0
          %v768 = vadd.f32 0.0, %v767
          %v769 = vpop.f32.mrf.mxu0
          %v770 = vpop.f32.mrf.mxu0
          %v771 = vadd.f32 0.0, %v770
          %v772 = vpop.f32.mrf.mxu0
          %773 = vmatprep.mubr.bf16.mxu0 0
          %774 = vmatmul.mubr.bf16.gmra.mxu0 %v648
          %v775 = vpop.f32.mrf.mxu0
          %v776 = vadd.f32 0.0, %v775
          %v777 = vpop.f32.mrf.mxu0
          %v778 = vpop.f32.mrf.mxu0
          %v779 = vadd.f32 0.0, %v778
          %v780 = vpop.f32.mrf.mxu0
          %781 = vmatprep.mubr.bf16.mxu0 0
          %782 = vmatmul.mubr.bf16.gmra.mxu0 %v649
          %v783 = vpop.f32.mrf.mxu0
          %v784 = vadd.f32 0.0, %v783
          %v785 = vpop.f32.mrf.mxu0
          %v786 = vpop.f32.mrf.mxu0
          %v787 = vadd.f32 0.0, %v786
          %v788 = vpop.f32.mrf.mxu0
          %789 = vmatprep.mubr.bf16.mxu0 0
          %790 = vmatmul.mubr.bf16.gmra.mxu0 %v650
          %v791 = vpop.f32.mrf.mxu0
          %v792 = vadd.f32 0.0, %v791
          %v793 = vpop.f32.mrf.mxu0
          %v794 = vpop.f32.mrf.mxu0
          %v795 = vadd.f32 0.0, %v794
          %v796 = vpop.f32.mrf.mxu0
          %797 = vmatprep.mubr.bf16.mxu0 0
          %798 = vmatmul.mubr.bf16.gmra.mxu0 %v651
          %v799 = vpop.f32.mrf.mxu0
          %v800 = vadd.f32 0.0, %v799
          %v801 = vpop.f32.mrf.mxu0
          %v802 = vpop.f32.mrf.mxu0
          %v803 = vadd.f32 0.0, %v802
          %v804 = vpop.f32.mrf.mxu0
          %805 = vmatprep.mubr.bf16.mxu0 0
          %806 = vmatmul.mubr.bf16.gmra.mxu0 %v652
          %v807 = vpop.f32.mrf.mxu0
          %v808 = vadd.f32 0.0, %v807
          %v809 = vpop.f32.mrf.mxu0
          %v810 = vpop.f32.mrf.mxu0
          %v811 = vadd.f32 0.0, %v810
          %v812 = vpop.f32.mrf.mxu0
          %813 = vdwg.mxu0
          %v814 = vpack.c.bf16 %v755, %v752
          %v815 = vpack.c.bf16 %v763, %v760
          %v816 = vpack.c.bf16 %v771, %v768
          %v817 = vpack.c.bf16 %v779, %v776
          %v818 = vpack.c.bf16 %v787, %v784
          %v819 = vpack.c.bf16 %v795, %v792
          %v820 = vpack.c.bf16 %v803, %v800
          %v821 = vpack.c.bf16 %v811, %v808
          %v830 = vunpack.c.l.b16 %v814
          %v831 = vunpack.c.h.b16 %v814
          %v832 = vunpack.c.l.b16 %v815
          %v833 = vunpack.c.h.b16 %v815
          %v834 = vunpack.c.l.b16 %v816
          %v835 = vunpack.c.h.b16 %v816
          %v836 = vunpack.c.l.b16 %v817
          %v837 = vunpack.c.h.b16 %v817
          %v838 = vunpack.c.l.b16 %v818
          %v839 = vunpack.c.h.b16 %v818
          %v840 = vunpack.c.l.b16 %v819
          %v841 = vunpack.c.h.b16 %v819
          %v842 = vunpack.c.l.b16 %v820
          %v843 = vunpack.c.h.b16 %v820
          %v844 = vunpack.c.l.b16 %v821
          %v845 = vunpack.c.h.b16 %v821
          %v846 = vpack.c.b16 %v830, %v830
          %v847 = vpack.c.b16 %v831, %v831
          %v848 = vpack.c.b16 %v832, %v832
          %v849 = vpack.c.b16 %v833, %v833
          %v850 = vpack.c.b16 %v834, %v834
          %v851 = vpack.c.b16 %v835, %v835
          %v852 = vpack.c.b16 %v836, %v836
          %v853 = vpack.c.b16 %v837, %v837
          %v854 = vpack.c.b16 %v838, %v838
          %v855 = vpack.c.b16 %v839, %v839
          %v856 = vpack.c.b16 %v840, %v840
          %v857 = vpack.c.b16 %v841, %v841
          %v858 = vpack.c.b16 %v842, %v842
          %v859 = vpack.c.b16 %v843, %v843
          %v860 = vpack.c.b16 %v844, %v844
          %v861 = vpack.c.b16 %v845, %v845
          %878 = vst [vmem:[%s313] sm:$0xf] %v846
          %879 = vst [vmem:[%s313 + $0x4] sm:$0xf] %v847
          %880 = vst [vmem:[%s313 + $0x8] sm:$0xf] %v848
          %881 = vst [vmem:[%s313 + $0xc] sm:$0xf] %v849
          %882 = vst [vmem:[%s313 + $0x10] sm:$0xf] %v850
          %883 = vst [vmem:[%s313 + $0x14] sm:$0xf] %v851
          %884 = vst [vmem:[%s313 + $0x18] sm:$0xf] %v852
          %885 = vst [vmem:[%s313 + $0x1c] sm:$0xf] %v853
          %886 = vst [vmem:[%s313 + $0x20] sm:$0xf] %v854
          %887 = vst [vmem:[%s313 + $0x24] sm:$0xf] %v855
          %888 = vst [vmem:[%s313 + $0x28] sm:$0xf] %v856
          %889 = vst [vmem:[%s313 + $0x2c] sm:$0xf] %v857
          %890 = vst [vmem:[%s313 + $0x30] sm:$0xf] %v858
          %891 = vst [vmem:[%s313 + $0x34] sm:$0xf] %v859
          %892 = vst [vmem:[%s313 + $0x38] sm:$0xf] %v860
          %893 = vst [vmem:[%s313 + $0x3c] sm:$0xf] %v861
        $region81: #{_lambda_.4} parent=68 // pred_fallthru
          _
        %s894 = smul.u32 16, %s18
        %p895 = scmp.lt.s32.totalorder %s894, 47
        %s896 = scalar_select %p895, %s894, 47
        %s897 = smul.addr %s896, 4
        %s898 = scalar_lea.vmem %s3, %s897
        // Predicated region
        $region82: #{_lambda_.4} parent=68 // pred_check
          %p899 = pneg %p119
        $region83: #{_lambda_.4} parent=68 // pred_check_branch
          %901 = sbr.rel (%p899) target = $region85
        $region84: #{_lambda_.4} parent=68 // pred_region
          %s902 = smul.u32 16, %s18
        $region85: #{_lambda_.4} parent=68 // pred_fallthru
          _
      $region69: #{_lambda_.4} parent=5 // pred_fallthru
        _
      %p903 = scmp.le.s32.totalorder 2, %s9
      // Predicated region
      $region86: #{_lambda_.4} parent=5 // pred_check
        %p904 = pneg %p903
      $region87: #{_lambda_.4} parent=5 // pred_check_branch
        %906 = sbr.rel (%p904) target = $region89
      $region88: #{_lambda_.4} parent=5 // pred_region
        %s907 = ssub.s32 %s9, 2
        // Predicated region
        $region90: #{_lambda_.4} parent=88 // pred_check
          %p908 = pneg %p125
        $region91: #{_lambda_.4} parent=88 // pred_check_branch
          %910 = sbr.rel (%p908) target = $region93
        $region92: #{_lambda_.4} parent=88 // pred_region
          %s911 = smul.u32 16, %s20
          %p912 = scmp.lt.s32.totalorder %s911, 47
          %s913 = scalar_select %p912, %s911, 47
          %s914 = smul.addr %s913, 4
          %s915 = scalar_lea.vmem %s3, %s914
        $region93: #{_lambda_.4} parent=88 // pred_fallthru
          _
      $region89: #{_lambda_.4} parent=5 // pred_fallthru
        _
    $region6: #{_lambda_.4} parent=1 // loop_footer
      %s13 = sadd.s32 1, %s9
    $region7: #{_lambda_.4} parent=1 // loop_footer_branch
      %8 = sbr.rel target = $region3
    $region8: #{_lambda_.4} parent=1 // loop_exit
      _

</llo_original>
